<compile_context>
chip_gen: v5e
topology: v5e:2x2
jax: 0.10.0
libtpu: 0.0.40
codegen_flags: <defaults>
</compile_context>

<pallas_src>
import functools
import math

import jax
import jax.numpy as jnp
import numpy as np
from jax.experimental import pallas as pl
from jax.experimental.pallas import tpu as pltpu

COMPUTE_DTYPE = jnp.bfloat16          # activations / conv weights; accumulate in f32
VMEM_LIMIT = 64 * 1024 * 1024         # safe on v5e/v6e/v7x, above the 16/32 MiB defaults

# channel multipliers of the 20 top-level cat-convs c1..c20 (from the reference)
CAT_MULT = [2, 3, 4, 2, 3, 4, 2, 3, 4, 2, 3, 4, 2, 3, 4, 5, 2, 3, 4, 5]


# ---------------------------------------------------------------------------
# Kernel A: fused DRLN Block
#   c0 -> r1 -> r2 -> r3 (residual blocks over the growing channel concat)
#      -> 1x1 gate conv (8C -> C, ReLU) -> CALayer gating.
# The channel concat is kept as 8 slots of C channels in one padded VMEM scratch.
# ---------------------------------------------------------------------------
def make_block_kernel(H, W, C):
    HW = H * W
    f32 = jnp.float32

    def kernel(x_ref,
               w_r1a, b_r1a, w_r1b, b_r1b,
               w_r2a, b_r2a, w_r2b, b_r2b,
               w_r3a, b_r3a, w_r3b, b_r3b,
               w_g, b_g, w_red, b_red, w_cat, b_cat,
               o_ref, comp, hcomp):
        relu = lambda t: jnp.maximum(t, 0.0)

        # zero once per step: borders stay zero, interiors are always overwritten
        comp[...] = jnp.zeros_like(comp)
        hcomp[...] = jnp.zeros_like(hcomp)

        def put(buf, slot, val_2d):                       # val_2d: [HW, C]
            buf[slot, 1:H + 1, 1:W + 1, :] = val_2d.reshape(H, W, C).astype(buf.dtype)

        def interior(buf, slot):                          # -> [HW, C] (compute dtype)
            return buf[slot][1:H + 1, 1:W + 1, :].reshape(HW, C)

        def conv3(buf, nslots, w_pk, b):
            """3x3 conv (pad=1) over slots 0..nslots-1 of `buf`, accumulated in f32."""
            cout = w_pk.shape[-1]
            acc = jnp.zeros((HW, cout), f32)
            for s in range(nslots):
                v = buf[s]                                # [H+2, W+2, C]
                for dy in range(3):
                    for dx in range(3):
                        patch = v[dy:dy + H, dx:dx + W, :].reshape(HW, C)
                        acc = acc + jnp.dot(patch, w_pk[s * 9 + dy * 3 + dx],
                                            preferred_element_type=f32)
            return acc + b[...]

        # ---- c0 -> slot 0
        comp[0, 1:H + 1, 1:W + 1, :] = x_ref[0].astype(comp.dtype)

        # ---- r1 = ResidualBlock(C) on c0
        h = relu(conv3(comp, 1, w_r1a, b_r1a))                              # [HW, C]
        put(hcomp, 0, h)
        r1 = relu(conv3(hcomp, 1, w_r1b, b_r1b) + interior(comp, 0).astype(f32))
        put(comp, 1, r1)

        # ---- r2 = ResidualBlock(2C) on c1 = slots[0:2]
        h = relu(conv3(comp, 2, w_r2a, b_r2a))                              # [HW, 2C]
        put(hcomp, 0, h[:, 0:C])
        put(hcomp, 1, h[:, C:2 * C])
        y = conv3(hcomp, 2, w_r2b, b_r2b)                                   # [HW, 2C]
        put(comp, 2, relu(y[:, 0:C] + interior(comp, 0).astype(f32)))
        put(comp, 3, relu(y[:, C:2 * C] + interior(comp, 1).astype(f32)))

        # ---- r3 = ResidualBlock(4C) on c2 = slots[0:4]
        h = relu(conv3(comp, 4, w_r3a, b_r3a))                              # [HW, 4C]
        for j in range(4):
            put(hcomp, j, h[:, j * C:(j + 1) * C])
        y = conv3(hcomp, 4, w_r3b, b_r3b)                                   # [HW, 4C]
        for j in range(4):
            put(comp, 4 + j, relu(y[:, j * C:(j + 1) * C] + interior(comp, j).astype(f32)))

        # ---- gate conv: 1x1 (8C -> C) + ReLU, over c3 = slots[0:8]
        acc = jnp.zeros((HW, C), f32)
        for k in range(8):
            acc = acc + jnp.dot(interior(comp, k), w_g[k], preferred_element_type=f32)
        g = relu(acc + b_g[...])                                            # [HW, C]

        # ---- CALayer (fused): global avg pool -> reduce matmuls -> sigmoid gate.
        # On the 1x1 pooled map the dilated 3x3 convs (pad == dilation) only see their
        # centre tap, so they collapse exactly to channel matmuls (w_red / w_cat).
        yv = jnp.mean(g, axis=0, keepdims=True)                             # [1, C]
        red = relu(jnp.dot(yv, w_red[...], preferred_element_type=f32) + b_red[...])
        gate = jax.nn.sigmoid(jnp.dot(red, w_cat[...], preferred_element_type=f32)
                              + b_cat[...])                                 # [1, C]
        o_ref[0] = (g * gate).reshape(H, W, C).astype(o_ref.dtype)

    return kernel


@jax.jit
def block_apply(x, bp):
    N, H, W, C = x.shape
    kernel = make_block_kernel(H, W, C)

    def fs(a):
        nd = len(a.shape)
        return pl.BlockSpec(a.shape, lambda n, _nd=nd: (0,) * _nd)

    weight_names = ["w_r1a", "b_r1a", "w_r1b", "b_r1b",
                    "w_r2a", "b_r2a", "w_r2b", "b_r2b",
                    "w_r3a", "b_r3a", "w_r3b", "b_r3b",
                    "w_g", "b_g", "w_red", "b_red", "w_cat", "b_cat"]
    weights = [bp[k] for k in weight_names]

    in_specs = ([pl.BlockSpec((1, H, W, C), lambda n: (n, 0, 0, 0))]
                + [fs(a) for a in weights])

    return pl.pallas_call(
        kernel,
        out_shape=jax.ShapeDtypeStruct((N, H, W, C), COMPUTE_DTYPE),
        grid=(N,),
        in_specs=in_specs,
        out_specs=pl.BlockSpec((1, H, W, C), lambda n: (n, 0, 0, 0)),
        scratch_shapes=[pltpu.VMEM((8, H + 2, W + 2, C), COMPUTE_DTYPE),   # c0|r1|r2|r3
                        pltpu.VMEM((4, H + 2, W + 2, C), COMPUTE_DTYPE)],  # residual h
        compiler_params=pltpu.CompilerParams(
            dimension_semantics=("parallel",),
            vmem_limit_bytes=VMEM_LIMIT),
    )(x, *weights)


# ---------------------------------------------------------------------------
# Kernel B: 3x3 conv (pad=1) + bias + activation over an *implicit* channel concat
# of S equal-width sources (split-input accumulation; concat never hits HBM).
# Used for head, the 20 top-level cat-convs, the upsample conv and the tail.
# ---------------------------------------------------------------------------
def make_cat_conv_kernel(H, W, S, Cin, Cout, act):
    HW = H * W
    f32 = jnp.float32

    def kernel(*refs):
        srcs = refs[:S]
        w_pk = refs[S]            # [S*9, Cin, Cout]
        b = refs[S + 1]           # [1, Cout] f32
        o_ref = refs[S + 2]
        pads = refs[S + 3]        # VMEM scratch [S, H+2, W+2, Cin]

        pads[...] = jnp.zeros_like(pads)
        for s in range(S):
            pads[s, 1:H + 1, 1:W + 1, :] = srcs[s][0].astype(pads.dtype)

        acc = jnp.zeros((HW, Cout), f32)
        for s in range(S):
            v = pads[s]
            for dy in range(3):
                for dx in range(3):
                    patch = v[dy:dy + H, dx:dx + W, :].reshape(HW, Cin)
                    acc = acc + jnp.dot(patch, w_pk[s * 9 + dy * 3 + dx],
                                        preferred_element_type=f32)
        acc = acc + b[...]
        if act == "relu":
            acc = jnp.maximum(acc, 0.0)
        o_ref[0] = acc.reshape(H, W, Cout).astype(o_ref.dtype)

    return kernel


@functools.partial(jax.jit, static_argnames=("act",))
def _cat_conv(srcs, w_pk, b, *, act):
    S = len(srcs)
    N, H, W, Cin = srcs[0].shape
    Cout = w_pk.shape[-1]
    kernel = make_cat_conv_kernel(H, W, S, Cin, Cout, act)

    src_spec = pl.BlockSpec((1, H, W, Cin), lambda n: (n, 0, 0, 0))
    in_specs = ([src_spec] * S
                + [pl.BlockSpec((S * 9, Cin, Cout), lambda n: (0, 0, 0)),
                   pl.BlockSpec((1, Cout), lambda n: (0, 0))])

    return pl.pallas_call(
        kernel,
        out_shape=jax.ShapeDtypeStruct((N, H, W, Cout), COMPUTE_DTYPE),
        grid=(N,),
        in_specs=in_specs,
        out_specs=pl.BlockSpec((1, H, W, Cout), lambda n: (n, 0, 0, 0)),
        scratch_shapes=[pltpu.VMEM((S, H + 2, W + 2, Cin), COMPUTE_DTYPE)],
        compiler_params=pltpu.CompilerParams(
            dimension_semantics=("parallel",),
            vmem_limit_bytes=VMEM_LIMIT),
    )(*srcs, w_pk, b)


def cat_conv(srcs, w_pk, b, act="relu"):
    return _cat_conv(tuple(srcs), w_pk, b, act=act)


# ---------------------------------------------------------------------------
# Parameter init (natural PyTorch-like layout) and one-time packing to kernel layout.
# ---------------------------------------------------------------------------
class KeyGen:
    def __init__(self, key):
        self.key = key

    def __call__(self):
        self.key, sub = jax.random.split(self.key)
        return sub


def init_conv(kg, cin, cout, k):
    fan = cin * k * k
    w = jax.random.normal(kg(), (k, k, cin, cout), jnp.float32) * (1.0 / np.sqrt(fan))
    b = jax.random.normal(kg(), (cout,), jnp.float32) * 0.01
    return {"w": w, "b": b}


def init_block(kg, C):
    R = C // 16
    return {
        "r1a": init_conv(kg, C, C, 3), "r1b": init_conv(kg, C, C, 3),
        "r2a": init_conv(kg, 2 * C, 2 * C, 3), "r2b": init_conv(kg, 2 * C, 2 * C, 3),
        "r3a": init_conv(kg, 4 * C, 4 * C, 3), "r3b": init_conv(kg, 4 * C, 4 * C, 3),
        "g": init_conv(kg, 8 * C, C, 1),
        "ca1": init_conv(kg, C, R, 3), "ca2": init_conv(kg, C, R, 3),
        "ca3": init_conv(kg, C, R, 3), "ca4": init_conv(kg, 3 * R, C, 3),
    }


def init_drln(kg, C, scale):
    assert C % 16 == 0, "CALayer reduction requires channels % 16 == 0"
    p = {"head": init_conv(kg, 3, C, 3)}
    p["blocks"] = [init_block(kg, C) for _ in range(20)]
    p["cats"] = [init_conv(kg, m * C, C, 3) for m in CAT_MULT]
    if scale in (2, 4, 8):
        p["up"] = [init_conv(kg, C, 4 * C, 3) for _ in range(int(math.log2(scale)))]
    else:  # scale == 3
        p["up"] = [init_conv(kg, C, 9 * C, 3)]
    p["tail"] = init_conv(kg, C, 3, 3)
    return p


def pack_conv3(w, S):
    """[3,3,S*Cin,Cout] -> [S*9, Cin, Cout] (bf16), slot-major / (dy,dx)-minor."""
    _, _, cin_tot, cout = w.shape
    cin = cin_tot // S
    return (w.reshape(3, 3, S, cin, cout).transpose(2, 0, 1, 3, 4)
            .reshape(S * 9, cin, cout).astype(COMPUTE_DTYPE))


def pack_block(bp, C):
    return {
        "w_r1a": pack_conv3(bp["r1a"]["w"], 1), "b_r1a": bp["r1a"]["b"].reshape(1, -1),
        "w_r1b": pack_conv3(bp["r1b"]["w"], 1), "b_r1b": bp["r1b"]["b"].reshape(1, -1),
        "w_r2a": pack_conv3(bp["r2a"]["w"], 2), "b_r2a": bp["r2a"]["b"].reshape(1, -1),
        "w_r2b": pack_conv3(bp["r2b"]["w"], 2), "b_r2b": bp["r2b"]["b"].reshape(1, -1),
        "w_r3a": pack_conv3(bp["r3a"]["w"], 4), "b_r3a": bp["r3a"]["b"].reshape(1, -1),
        "w_r3b": pack_conv3(bp["r3b"]["w"], 4), "b_r3b": bp["r3b"]["b"].reshape(1, -1),
        "w_g": bp["g"]["w"].reshape(8, C, C).astype(COMPUTE_DTYPE),
        "b_g": bp["g"]["b"].reshape(1, -1),
        # CALayer weights collapse to centre taps on the 1x1 pooled map (pad == dilation).
        "w_red": jnp.concatenate([bp["ca1"]["w"][1, 1], bp["ca2"]["w"][1, 1],
                                  bp["ca3"]["w"][1, 1]], axis=1),            # [C, 3R]
        "b_red": jnp.concatenate([bp["ca1"]["b"], bp["ca2"]["b"],
                                  bp["ca3"]["b"]]).reshape(1, -1),           # [1, 3R]
        "w_cat": bp["ca4"]["w"][1, 1],                                       # [3R, C]
        "b_cat": bp["ca4"]["b"].reshape(1, -1),                              # [1, C]
    }


def pack_drln(raw, C):
    return {
        "head": {"w": pack_conv3(raw["head"]["w"], 1),
                 "b": raw["head"]["b"].reshape(1, -1)},
        "blocks": [pack_block(bp, C) for bp in raw["blocks"]],
        "cats": [{"w": pack_conv3(p["w"], m), "b": p["b"].reshape(1, -1)}
                 for p, m in zip(raw["cats"], CAT_MULT)],
        "up": [{"w": pack_conv3(p["w"], 1), "b": p["b"].reshape(1, -1)}
               for p in raw["up"]],
        "tail": {"w": pack_conv3(raw["tail"]["w"], 1),
                 "b": raw["tail"]["b"].reshape(1, -1)},
    }


# ---------------------------------------------------------------------------
# Model glue (plain JAX): mean shift, pixel shuffle, skip adds, block wiring.
# ---------------------------------------------------------------------------
def pixel_shuffle(x, r):
    N, H, W, Crr = x.shape
    C = Crr // (r * r)
    x = x.reshape(N, H, W, C, r, r)
    x = jnp.transpose(x, (0, 1, 4, 2, 5, 3))
    return x.reshape(N, H * r, W * r, C)


def upsample(p_list, x, scale):
    # TODO(synk): fuse the pixel-shuffle scatter into the conv's output write.
    if scale == 3:
        x = cat_conv((x,), p_list[0]["w"], p_list[0]["b"], act="relu")
        return pixel_shuffle(x, 3)
    for p in p_list:
        x = cat_conv((x,), p["w"], p["b"], act="relu")
        x = pixel_shuffle(x, 2)
    return x


def drln_forward(params, x_nchw, scale):
    # DRLN's MeanShift (ops.py) is an identity 1x1 conv with bias = +/- mean (no
    # rgb_range/std scaling), so a plain subtract/add of the mean is exact.
    rgb_mean = jnp.array([0.4488, 0.4371, 0.404], jnp.float32)

    x = jnp.transpose(x_nchw, (0, 2, 3, 1))                     # NCHW -> NHWC
    x = (x - rgb_mean).astype(COMPUTE_DTYPE)                    # sub_mean
    x = cat_conv((x,), params["head"]["w"], params["head"]["b"], act="none")

    B, CC = params["blocks"], params["cats"]
    blk = lambda i, inp: block_apply(inp, B[i])
    cc = lambda i, *srcs: cat_conv(srcs, CC[i]["w"], CC[i]["b"], act="relu")

    c0 = x
    b1 = blk(0, c0);    o1 = cc(0, c0, b1)
    b2 = blk(1, o1);    o2 = cc(1, c0, b1, b2)
    b3 = blk(2, o2);    o3 = cc(2, c0, b1, b2, b3)
    a1 = o3 + c0
    b4 = blk(3, a1);    o4 = cc(3, o3, b4)
    b5 = blk(4, a1);    o5 = cc(4, o3, b4, b5)
    b6 = blk(5, o5);    o6 = cc(5, o3, b4, b5, b6)
    a2 = o6 + a1
    b7 = blk(6, a2);    o7 = cc(6, o6, b7)
    b8 = blk(7, o7);    o8 = cc(7, o6, b7, b8)
    b9 = blk(8, o8);    o9 = cc(8, o6, b7, b8, b9)
    a3 = o9 + a2
    b10 = blk(9, a3);   o10 = cc(9, o9, b10)
    b11 = blk(10, o10); o11 = cc(10, o9, b10, b11)
    b12 = blk(11, o11); o12 = cc(11, o9, b10, b11, b12)
    a4 = o12 + a3
    b13 = blk(12, a4);  o13 = cc(12, o12, b13)
    b14 = blk(13, o13); o14 = cc(13, o12, b13, b14)
    b15 = blk(14, o14); o15 = cc(14, o12, b13, b14, b15)
    b16 = blk(15, o15); o16 = cc(15, o12, b13, b14, b15, b16)
    a5 = o16 + a4
    b17 = blk(16, a5);  o17 = cc(16, o16, b17)
    b18 = blk(17, o17); o18 = cc(17, o16, b17, b18)
    b19 = blk(18, o18); o19 = cc(18, o16, b17, b18, b19)
    b20 = blk(19, o19); o20 = cc(19, o16, b17, b18, b19, b20)
    a6 = o20 + a5

    b_out = a6 + x
    out = upsample(params["up"], b_out, scale)
    out = cat_conv((out,), params["tail"]["w"], params["tail"]["b"], act="none")
    out = out.astype(jnp.float32) + rgb_mean                    # add_mean
    return jnp.transpose(out, (0, 3, 1, 2))                     # back to NCHW


# ---------------------------------------------------------------------------
if __name__ == "__main__":
    CHANNELS = 16     # small, but keeps channel // 16 >= 1 for the CALayer reduction
    SCALE = 2
    N, H, W = 2, 16, 16

    raw_params = init_drln(KeyGen(jax.random.PRNGKey(1)), CHANNELS, SCALE)
    params = pack_drln(raw_params, CHANNELS)

    x = jax.random.uniform(jax.random.PRNGKey(0), (N, 3, H, W), jnp.float32)

    out = drln_forward(params, x, SCALE)
    out = jax.block_until_ready(out)

    assert out.shape == (N, 3, H * SCALE, W * SCALE), out.shape
    assert out.dtype == jnp.float32
    print("KERNEL_OK")
</pallas_src>

<mosaic_0001>
module attributes {stable_mosaic.version = 11 : i64} {
  func.func @kernel(%arg0: i32, %arg1: memref<1x16x16x3xbf16, #tpu.memory_space<vmem>>, %arg2: memref<9x3x16xbf16, #tpu.memory_space<vmem>>, %arg3: memref<1x16xf32, #tpu.memory_space<vmem>>, %arg4: memref<1x16x16x16xbf16, #tpu.memory_space<vmem>>, %arg5: memref<1x18x18x3xbf16, #tpu.memory_space<vmem>>) attributes {dimension_semantics = [#tpu.dimension_semantics<parallel>], iteration_bounds = array<i64: 2>, scalar_prefetch = 0 : i64, scratch_operands = 1 : i64, tpu.core_type = #tpu.core_type<tc>, window_params = [{transform_indices = @transform_0, window_bounds = array<i64: 1, 16, 16, 3>}, {pipeline_mode = #tpu.pipeline_mode<synchronous>, transform_indices = @transform_1, window_bounds = array<i64: 9, 3, 16>}, {pipeline_mode = #tpu.pipeline_mode<synchronous>, transform_indices = @transform_2, window_bounds = array<i64: 1, 16>}, {transform_indices = @transform_3, window_bounds = array<i64: 1, 16, 16, 16>}]} {
    %cst = arith.constant 0.000000e+00 : bf16
    %0 = vector.broadcast %cst : bf16 to vector<1x18x18x3xbf16>
    %c0 = arith.constant 0 : index
    %c0_0 = arith.constant 0 : index
    %c0_1 = arith.constant 0 : index
    %c0_2 = arith.constant 0 : index
    %1 = vector.load %arg5[%c0, %c0_0, %c0_1, %c0_2] : memref<1x18x18x3xbf16, #tpu.memory_space<vmem>>, vector<1x18x18x3xbf16>
    tpu.vector_store %arg5[%c0, %c0_0, %c0_1, %c0_2], %0 {strides = array<i32>} : memref<1x18x18x3xbf16, #tpu.memory_space<vmem>>, vector<1x18x18x3xbf16>,
    %c0_3 = arith.constant 0 : index
    %c0_4 = arith.constant 0 : index
    %c0_5 = arith.constant 0 : index
    %c0_6 = arith.constant 0 : index
    %2 = vector.load %arg1[%c0_3, %c0_4, %c0_5, %c0_6] : memref<1x16x16x3xbf16, #tpu.memory_space<vmem>>, vector<1x16x16x3xbf16>
    %3 = vector.shape_cast %2 : vector<1x16x16x3xbf16> to vector<16x16x3xbf16>
    %c0_7 = arith.constant 0 : index
    %c1 = arith.constant 1 : index
    %c1_8 = arith.constant 1 : index
    %c0_9 = arith.constant 0 : index
    %4 = vector.load %arg5[%c0_7, %c1, %c1_8, %c0_9] : memref<1x18x18x3xbf16, #tpu.memory_space<vmem>>, vector<1x16x16x3xbf16>
    %5 = vector.shape_cast %4 : vector<1x16x16x3xbf16> to vector<16x16x3xbf16>
    %6 = vector.shape_cast %3 : vector<16x16x3xbf16> to vector<1x16x16x3xbf16>
    tpu.vector_store %arg5[%c0_7, %c1, %c1_8, %c0_9], %6 {strides = array<i32>} : memref<1x18x18x3xbf16, #tpu.memory_space<vmem>>, vector<1x16x16x3xbf16>,
    %cst_10 = arith.constant 0.000000e+00 : f32
    %7 = vector.broadcast %cst_10 : f32 to vector<256x16xf32>
    %c0_11 = arith.constant 0 : index
    %c0_12 = arith.constant 0 : index
    %c0_13 = arith.constant 0 : index
    %c0_14 = arith.constant 0 : index
    %8 = vector.load %arg5[%c0_11, %c0_12, %c0_13, %c0_14] : memref<1x18x18x3xbf16, #tpu.memory_space<vmem>>, vector<1x18x18x3xbf16>
    %9 = vector.shape_cast %8 : vector<1x18x18x3xbf16> to vector<18x18x3xbf16>
    %10 = vector.extract_strided_slice %9 {offsets = [0, 0, 0], sizes = [16, 16, 3], strides = [1, 1, 1]} : vector<18x18x3xbf16> to vector<16x16x3xbf16>
    %11 = vector.shape_cast %10 : vector<16x16x3xbf16> to vector<256x3xbf16>
    %c0_15 = arith.constant 0 : index
    %c0_16 = arith.constant 0 : index
    %c0_17 = arith.constant 0 : index
    %12 = vector.load %arg2[%c0_15, %c0_16, %c0_17] : memref<9x3x16xbf16, #tpu.memory_space<vmem>>, vector<1x3x16xbf16>
    %13 = vector.shape_cast %12 : vector<1x3x16xbf16> to vector<3x16xbf16>
    %cst_18 = arith.constant dense<0.000000e+00> : vector<256x16xf32>
    %14 = tpu.matmul %11, %13, %cst_18 {dimension_numbers = #tpu.dot_dimension_numbers<[1], [0], [0], [1], [0, 0, 1, 1], [], []>} : vector<256x3xbf16>, vector<3x16xbf16>, vector<256x16xf32> -> vector<256x16xf32>
    %15 = arith.addf %7, %14 : vector<256x16xf32>
    %16 = vector.extract_strided_slice %9 {offsets = [0, 1, 0], sizes = [16, 16, 3], strides = [1, 1, 1]} : vector<18x18x3xbf16> to vector<16x16x3xbf16>
    %17 = vector.shape_cast %16 : vector<16x16x3xbf16> to vector<256x3xbf16>
    %c1_19 = arith.constant 1 : index
    %c0_20 = arith.constant 0 : index
    %c0_21 = arith.constant 0 : index
    %18 = vector.load %arg2[%c1_19, %c0_20, %c0_21] : memref<9x3x16xbf16, #tpu.memory_space<vmem>>, vector<1x3x16xbf16>
    %19 = vector.shape_cast %18 : vector<1x3x16xbf16> to vector<3x16xbf16>
    %cst_22 = arith.constant dense<0.000000e+00> : vector<256x16xf32>
    %20 = tpu.matmul %17, %19, %cst_22 {dimension_numbers = #tpu.dot_dimension_numbers<[1], [0], [0], [1], [0, 0, 1, 1], [], []>} : vector<256x3xbf16>, vector<3x16xbf16>, vector<256x16xf32> -> vector<256x16xf32>
    %21 = arith.addf %15, %20 : vector<256x16xf32>
    %22 = vector.extract_strided_slice %9 {offsets = [0, 2, 0], sizes = [16, 16, 3], strides = [1, 1, 1]} : vector<18x18x3xbf16> to vector<16x16x3xbf16>
    %23 = vector.shape_cast %22 : vector<16x16x3xbf16> to vector<256x3xbf16>
    %c2 = arith.constant 2 : index
    %c0_23 = arith.constant 0 : index
    %c0_24 = arith.constant 0 : index
    %24 = vector.load %arg2[%c2, %c0_23, %c0_24] : memref<9x3x16xbf16, #tpu.memory_space<vmem>>, vector<1x3x16xbf16>
    %25 = vector.shape_cast %24 : vector<1x3x16xbf16> to vector<3x16xbf16>
    %cst_25 = arith.constant dense<0.000000e+00> : vector<256x16xf32>
    %26 = tpu.matmul %23, %25, %cst_25 {dimension_numbers = #tpu.dot_dimension_numbers<[1], [0], [0], [1], [0, 0, 1, 1], [], []>} : vector<256x3xbf16>, vector<3x16xbf16>, vector<256x16xf32> -> vector<256x16xf32>
    %27 = arith.addf %21, %26 : vector<256x16xf32>
    %28 = vector.extract_strided_slice %9 {offsets = [1, 0, 0], sizes = [16, 16, 3], strides = [1, 1, 1]} : vector<18x18x3xbf16> to vector<16x16x3xbf16>
    %29 = vector.shape_cast %28 : vector<16x16x3xbf16> to vector<256x3xbf16>
    %c3 = arith.constant 3 : index
    %c0_26 = arith.constant 0 : index
    %c0_27 = arith.constant 0 : index
    %30 = vector.load %arg2[%c3, %c0_26, %c0_27] : memref<9x3x16xbf16, #tpu.memory_space<vmem>>, vector<1x3x16xbf16>
    %31 = vector.shape_cast %30 : vector<1x3x16xbf16> to vector<3x16xbf16>
    %cst_28 = arith.constant dense<0.000000e+00> : vector<256x16xf32>
    %32 = tpu.matmul %29, %31, %cst_28 {dimension_numbers = #tpu.dot_dimension_numbers<[1], [0], [0], [1], [0, 0, 1, 1], [], []>} : vector<256x3xbf16>, vector<3x16xbf16>, vector<256x16xf32> -> vector<256x16xf32>
    %33 = arith.addf %27, %32 : vector<256x16xf32>
    %34 = vector.extract_strided_slice %9 {offsets = [1, 1, 0], sizes = [16, 16, 3], strides = [1, 1, 1]} : vector<18x18x3xbf16> to vector<16x16x3xbf16>
    %35 = vector.shape_cast %34 : vector<16x16x3xbf16> to vector<256x3xbf16>
    %c4 = arith.constant 4 : index
    %c0_29 = arith.constant 0 : index
    %c0_30 = arith.constant 0 : index
    %36 = vector.load %arg2[%c4, %c0_29, %c0_30] : memref<9x3x16xbf16, #tpu.memory_space<vmem>>, vector<1x3x16xbf16>
    %37 = vector.shape_cast %36 : vector<1x3x16xbf16> to vector<3x16xbf16>
    %cst_31 = arith.constant dense<0.000000e+00> : vector<256x16xf32>
    %38 = tpu.matmul %35, %37, %cst_31 {dimension_numbers = #tpu.dot_dimension_numbers<[1], [0], [0], [1], [0, 0, 1, 1], [], []>} : vector<256x3xbf16>, vector<3x16xbf16>, vector<256x16xf32> -> vector<256x16xf32>
    %39 = arith.addf %33, %38 : vector<256x16xf32>
    %40 = vector.extract_strided_slice %9 {offsets = [1, 2, 0], sizes = [16, 16, 3], strides = [1, 1, 1]} : vector<18x18x3xbf16> to vector<16x16x3xbf16>
    %41 = vector.shape_cast %40 : vector<16x16x3xbf16> to vector<256x3xbf16>
    %c5 = arith.constant 5 : index
    %c0_32 = arith.constant 0 : index
    %c0_33 = arith.constant 0 : index
    %42 = vector.load %arg2[%c5, %c0_32, %c0_33] : memref<9x3x16xbf16, #tpu.memory_space<vmem>>, vector<1x3x16xbf16>
    %43 = vector.shape_cast %42 : vector<1x3x16xbf16> to vector<3x16xbf16>
    %cst_34 = arith.constant dense<0.000000e+00> : vector<256x16xf32>
    %44 = tpu.matmul %41, %43, %cst_34 {dimension_numbers = #tpu.dot_dimension_numbers<[1], [0], [0], [1], [0, 0, 1, 1], [], []>} : vector<256x3xbf16>, vector<3x16xbf16>, vector<256x16xf32> -> vector<256x16xf32>
    %45 = arith.addf %39, %44 : vector<256x16xf32>
    %46 = vector.extract_strided_slice %9 {offsets = [2, 0, 0], sizes = [16, 16, 3], strides = [1, 1, 1]} : vector<18x18x3xbf16> to vector<16x16x3xbf16>
    %47 = vector.shape_cast %46 : vector<16x16x3xbf16> to vector<256x3xbf16>
    %c6 = arith.constant 6 : index
    %c0_35 = arith.constant 0 : index
    %c0_36 = arith.constant 0 : index
    %48 = vector.load %arg2[%c6, %c0_35, %c0_36] : memref<9x3x16xbf16, #tpu.memory_space<vmem>>, vector<1x3x16xbf16>
    %49 = vector.shape_cast %48 : vector<1x3x16xbf16> to vector<3x16xbf16>
    %cst_37 = arith.constant dense<0.000000e+00> : vector<256x16xf32>
    %50 = tpu.matmul %47, %49, %cst_37 {dimension_numbers = #tpu.dot_dimension_numbers<[1], [0], [0], [1], [0, 0, 1, 1], [], []>} : vector<256x3xbf16>, vector<3x16xbf16>, vector<256x16xf32> -> vector<256x16xf32>
    %51 = arith.addf %45, %50 : vector<256x16xf32>
    %52 = vector.extract_strided_slice %9 {offsets = [2, 1, 0], sizes = [16, 16, 3], strides = [1, 1, 1]} : vector<18x18x3xbf16> to vector<16x16x3xbf16>
    %53 = vector.shape_cast %52 : vector<16x16x3xbf16> to vector<256x3xbf16>
    %c7 = arith.constant 7 : index
    %c0_38 = arith.constant 0 : index
    %c0_39 = arith.constant 0 : index
    %54 = vector.load %arg2[%c7, %c0_38, %c0_39] : memref<9x3x16xbf16, #tpu.memory_space<vmem>>, vector<1x3x16xbf16>
    %55 = vector.shape_cast %54 : vector<1x3x16xbf16> to vector<3x16xbf16>
    %cst_40 = arith.constant dense<0.000000e+00> : vector<256x16xf32>
    %56 = tpu.matmul %53, %55, %cst_40 {dimension_numbers = #tpu.dot_dimension_numbers<[1], [0], [0], [1], [0, 0, 1, 1], [], []>} : vector<256x3xbf16>, vector<3x16xbf16>, vector<256x16xf32> -> vector<256x16xf32>
    %57 = arith.addf %51, %56 : vector<256x16xf32>
    %58 = vector.extract_strided_slice %9 {offsets = [2, 2, 0], sizes = [16, 16, 3], strides = [1, 1, 1]} : vector<18x18x3xbf16> to vector<16x16x3xbf16>
    %59 = vector.shape_cast %58 : vector<16x16x3xbf16> to vector<256x3xbf16>
    %c8 = arith.constant 8 : index
    %c0_41 = arith.constant 0 : index
    %c0_42 = arith.constant 0 : index
    %60 = vector.load %arg2[%c8, %c0_41, %c0_42] : memref<9x3x16xbf16, #tpu.memory_space<vmem>>, vector<1x3x16xbf16>
    %61 = vector.shape_cast %60 : vector<1x3x16xbf16> to vector<3x16xbf16>
    %cst_43 = arith.constant dense<0.000000e+00> : vector<256x16xf32>
    %62 = tpu.matmul %59, %61, %cst_43 {dimension_numbers = #tpu.dot_dimension_numbers<[1], [0], [0], [1], [0, 0, 1, 1], [], []>} : vector<256x3xbf16>, vector<3x16xbf16>, vector<256x16xf32> -> vector<256x16xf32>
    %63 = arith.addf %57, %62 : vector<256x16xf32>
    %c0_44 = arith.constant 0 : index
    %c0_45 = arith.constant 0 : index
    %64 = vector.load %arg3[%c0_44, %c0_45] : memref<1x16xf32, #tpu.memory_space<vmem>>, vector<1x16xf32>
    %65 = vector.broadcast %64 : vector<1x16xf32> to vector<256x16xf32>
    %66 = arith.addf %63, %65 : vector<256x16xf32>
    %67 = vector.shape_cast %66 : vector<256x16xf32> to vector<16x16x16xf32>
    %68 = arith.truncf %67 : vector<16x16x16xf32> to vector<16x16x16xbf16>
    %c0_46 = arith.constant 0 : index
    %c0_47 = arith.constant 0 : index
    %c0_48 = arith.constant 0 : index
    %c0_49 = arith.constant 0 : index
    %69 = vector.load %arg4[%c0_46, %c0_47, %c0_48, %c0_49] : memref<1x16x16x16xbf16, #tpu.memory_space<vmem>>, vector<1x16x16x16xbf16>
    %70 = vector.shape_cast %69 : vector<1x16x16x16xbf16> to vector<16x16x16xbf16>
    %71 = vector.shape_cast %68 : vector<16x16x16xbf16> to vector<1x16x16x16xbf16>
    tpu.vector_store %arg4[%c0_46, %c0_47, %c0_48, %c0_49], %71 {strides = array<i32>} : memref<1x16x16x16xbf16, #tpu.memory_space<vmem>>, vector<1x16x16x16xbf16>,
    return
  }
  func.func @transform_0(%arg0: i32) -> (i32, i32, i32, i32) {
    %c0_i32 = arith.constant 0 : i32
    %c0_i32_0 = arith.constant 0 : i32
    %c0_i32_1 = arith.constant 0 : i32
    %c0_i32_2 = arith.constant 0 : i32
    return %arg0, %c0_i32, %c0_i32_0, %c0_i32_1 : i32, i32, i32, i32
  }
  func.func @transform_1(%arg0: i32) -> (i32, i32, i32) {
    %c0_i32 = arith.constant 0 : i32
    %c0_i32_0 = arith.constant 0 : i32
    %c0_i32_1 = arith.constant 0 : i32
    %c0_i32_2 = arith.constant 0 : i32
    return %c0_i32, %c0_i32_0, %c0_i32_1 : i32, i32, i32
  }
  func.func @transform_2(%arg0: i32) -> (i32, i32) {
    %c0_i32 = arith.constant 0 : i32
    %c0_i32_0 = arith.constant 0 : i32
    %c0_i32_1 = arith.constant 0 : i32
    return %c0_i32, %c0_i32_0 : i32, i32
  }
  func.func @transform_3(%arg0: i32) -> (i32, i32, i32, i32) {
    %c0_i32 = arith.constant 0 : i32
    %c0_i32_0 = arith.constant 0 : i32
    %c0_i32_1 = arith.constant 0 : i32
    %c0_i32_2 = arith.constant 0 : i32
    return %arg0, %c0_i32, %c0_i32_0, %c0_i32_1 : i32, i32, i32, i32
  }
}

</mosaic_0001>

<llo_original>
// kernel: _cat_conv.1
$region0: #{_cat_conv.1}
  #allocation0 [shape = 'u32[]', space=smem, size = 0x4, offset = 0x4, fixed_abs, tag = 'smem constant byte address 0x4 - core index']
  #allocation1 [shape = 'u32[72,128]{1,0:T(1,128)}', space=vmem, size = 0x9000, scoped, tag = 'internal scratch']
  #allocation2 [shape = 'bf16[1,18,18,3]{3,2,1,0:T(8,128)(2,1)}', space=vmem, size = 0x1b000, scoped, tag = 'scratch operand']
  %s0 = inlined_call_operand.vmem [shape: bf16[2,16,16,3], index: 0, kind: input, shape index: {}]
  %s1 = inlined_call_operand.vmem [shape: bf16[9,3,16], index: 1, kind: input, shape index: {}]
  %s2 = inlined_call_operand.vmem [shape: f32[1,16], index: 2, kind: input, shape index: {}]
  %s3 = inlined_call_operand.hbm [shape: bf16[2,16,16,16], index: 3, kind: output, shape index: {}]
  %s4 = sld [smem:[#allocation0]]
  $region45: #{_cat_conv.1} parent=0
    _
  %s6 = ssub.s32 1, %s4
  %s7 = scalar_select 0, %s6, %s4
  $region1: #{_cat_conv.1} parent=0
    #allocation3 [shape = 'u8[131072]{0}', space=vmem, size = 0x20000, scoped, tag = 'output window, operand 0']
    #allocation4 [shape = 's32[2]{0}', space=sflag, size = 0x8, scoped, tag = 'scoped memory for _cat_conv.1']
    %8 = vsyncpa [#allocation4], 0
    %s9 = scalar_lea.sflag [#allocation4], 1
    %10 = vsyncpa %s9, 0
    loop: start=0, step=1, limit=4
    $region2: #{_cat_conv.1} parent=1 // loop_pre_header
      _
    $region3: #{_cat_conv.1} parent=1 // loop_header
      %s12 = sphi 0, %s16
      %p13 = scmp.ge.s32.totalorder %s12, 4
      %s22 = sphi 0, %s24
      %s25 = sphi 0, %s22
      %s26 = sphi 0, %s25
      %s42 = sphi 0, %s26
      %s46 = sphi 0, %s46
      %s48 = sphi 0, %s46
      %s49 = sphi 0, %s48
      %s63 = sphi 0, %s49
      %s67 = sphi 0, %s67
      %s69 = sphi 0, %s67
      %s70 = sphi 0, %s69
      %s84 = sphi 0, %s70
      %s90 = sphi 0, %s92
      %s93 = sphi 0, %s90
      %s94 = sphi 0, %s93
      %s110 = sphi 0, %s94
    $region4: #{_cat_conv.1} parent=1 // loop_header_branch
      %15 = sbr.rel (%p13) target = $region8
    $region5: #{_cat_conv.1} parent=1 // loop_body
      %s17 = ssub.s32 %s12, 1
      %s18 = ssub.s32 %s12, 2
      %s19 = sadd.s32 %s12, 1
      %s20 = ssub.s32 %s12, %s19
      %p21 = scmp.eq.s32.totalorder %s20, 0
      %s23 = sadd.s32 %s22, 1
      %s24 = scalar_select %p21, %s22, %s23
      %p27 = pneg %p21
      %p28 = scmp.eq.s32.totalorder %s12, 1
      %p29 = por %p27, %p28
      %p30 = scmp.ne.s32.totalorder %s22, %s25
      %p31 = scmp.eq.s32.totalorder %s12, 0
      %p32 = por %p30, %p31
      %p33 = scmp.ne.s32.totalorder %s22, %s25
      %p34 = scmp.eq.s32.totalorder %s17, 1
      %p35 = por %p33, %p34
      %p36 = scmp.ne.s32.totalorder %s25, %s26
      %p37 = scmp.eq.s32.totalorder %s17, 0
      %p38 = por %p36, %p37
      %p39 = scmp.ne.s32.totalorder %s25, %s26
      %p40 = scmp.eq.s32.totalorder %s18, 1
      %p41 = por %p39, %p40
      %p43 = scmp.ne.s32.totalorder %s26, %s42
      %p44 = scmp.eq.s32.totalorder %s18, 0
      %p45 = por %p43, %p44
      %s47 = sadd.s32 %s46, 1
      %p50 = scmp.eq.s32.totalorder %s12, 1
      %p51 = scmp.ne.s32.totalorder %s46, %s48
      %p52 = scmp.eq.s32.totalorder %s12, 0
      %p53 = por %p51, %p52
      %p54 = scmp.ne.s32.totalorder %s46, %s48
      %p55 = scmp.eq.s32.totalorder %s17, 1
      %p56 = por %p54, %p55
      %p57 = scmp.ne.s32.totalorder %s48, %s49
      %p58 = scmp.eq.s32.totalorder %s17, 0
      %p59 = por %p57, %p58
      %p60 = scmp.ne.s32.totalorder %s48, %s49
      %p61 = scmp.eq.s32.totalorder %s18, 1
      %p62 = por %p60, %p61
      %p64 = scmp.ne.s32.totalorder %s49, %s63
      %p65 = scmp.eq.s32.totalorder %s18, 0
      %p66 = por %p64, %p65
      %s68 = sadd.s32 %s67, 1
      %p71 = scmp.eq.s32.totalorder %s12, 1
      %p72 = scmp.ne.s32.totalorder %s67, %s69
      %p73 = scmp.eq.s32.totalorder %s12, 0
      %p74 = por %p72, %p73
      %p75 = scmp.ne.s32.totalorder %s67, %s69
      %p76 = scmp.eq.s32.totalorder %s17, 1
      %p77 = por %p75, %p76
      %p78 = scmp.ne.s32.totalorder %s69, %s70
      %p79 = scmp.eq.s32.totalorder %s17, 0
      %p80 = por %p78, %p79
      %p81 = scmp.ne.s32.totalorder %s69, %s70
      %p82 = scmp.eq.s32.totalorder %s18, 1
      %p83 = por %p81, %p82
      %p85 = scmp.ne.s32.totalorder %s70, %s84
      %p86 = scmp.eq.s32.totalorder %s18, 0
      %p87 = por %p85, %p86
      %s88 = ssub.s32 %s12, %s19
      %p89 = scmp.eq.s32.totalorder %s88, 0
      %s91 = sadd.s32 %s90, 1
      %s92 = scalar_select %p89, %s90, %s91
      %p95 = pneg %p89
      %p96 = scmp.eq.s32.totalorder %s12, 1
      %p97 = por %p95, %p96
      %p98 = scmp.ne.s32.totalorder %s90, %s93
      %p99 = scmp.eq.s32.totalorder %s12, 0
      %p100 = por %p98, %p99
      %p101 = scmp.ne.s32.totalorder %s90, %s93
      %p102 = scmp.eq.s32.totalorder %s17, 1
      %p103 = por %p101, %p102
      %p104 = scmp.ne.s32.totalorder %s93, %s94
      %p105 = scmp.eq.s32.totalorder %s17, 0
      %p106 = por %p104, %p105
      %p107 = scmp.ne.s32.totalorder %s93, %s94
      %p108 = scmp.eq.s32.totalorder %s18, 1
      %p109 = por %p107, %p108
      %p111 = scmp.ne.s32.totalorder %s94, %s110
      %p112 = scmp.eq.s32.totalorder %s18, 0
      %p113 = por %p111, %p112
      %p114 = scmp.le.s32.totalorder 1, %s12
      %p115 = scmp.lt.s32.totalorder %s12, 3
      %p116 = pnand %p114, %p115
      %p117 = pneg %p116
      // Predicated region
      $region9: #{_cat_conv.1} parent=5 // pred_check
        _
      $region10: #{_cat_conv.1} parent=5 // pred_check_branch
        %119 = sbr.rel (%p116) target = $region12
      $region11: #{_cat_conv.1} parent=5 // pred_region
        %s120 = ssub.s32 %s12, 1
        // Predicated region
        $region13: #{_cat_conv.1} parent=11 // pred_check
          %p121 = pneg %p59
        $region14: #{_cat_conv.1} parent=11 // pred_check_branch
          %123 = sbr.rel (%p121) target = $region16
        $region15: #{_cat_conv.1} parent=11 // pred_region
          _
        $region16: #{_cat_conv.1} parent=11 // pred_fallthru
          _
        // Predicated region
        $region17: #{_cat_conv.1} parent=11 // pred_check
          %p124 = pneg %p80
        $region18: #{_cat_conv.1} parent=11 // pred_check_branch
          %126 = sbr.rel (%p124) target = $region20
        $region19: #{_cat_conv.1} parent=11 // pred_region
          _
        $region20: #{_cat_conv.1} parent=11 // pred_fallthru
          _
      $region12: #{_cat_conv.1} parent=5 // pred_fallthru
        _
      %p127 = scmp.lt.s32.totalorder %s12, 2
      // Predicated region
      $region21: #{_cat_conv.1} parent=5 // pred_check
        %p128 = pneg %p127
      $region22: #{_cat_conv.1} parent=5 // pred_check_branch
        %130 = sbr.rel (%p128) target = $region24
      $region23: #{_cat_conv.1} parent=5 // pred_region
        // Predicated region
        $region25: #{_cat_conv.1} parent=23 // pred_check
          %p131 = pneg %p32
        $region26: #{_cat_conv.1} parent=23 // pred_check_branch
          %133 = sbr.rel (%p131) target = $region28
        $region27: #{_cat_conv.1} parent=23 // pred_region
          %p134 = scmp.lt.s32.totalorder %s12, 1
          %s135 = scalar_select %p134, %s12, 1
          %s136 = smul.addr %s135, 32
          %s137 = smul.addr %s136, 4
          %s138 = scalar_lea.vmem %s0, %s137
        $region28: #{_cat_conv.1} parent=23 // pred_fallthru
          _
      $region24: #{_cat_conv.1} parent=5 // pred_fallthru
        _
      %p139 = scmp.le.s32.totalorder 1, %s12
      %p140 = scmp.lt.s32.totalorder %s12, 3
      %p141 = pnand %p139, %p140
      %p142 = pneg %p141
      // Predicated region
      $region29: #{_cat_conv.1} parent=5 // pred_check
        _
      $region30: #{_cat_conv.1} parent=5 // pred_check_branch
        %144 = sbr.rel (%p141) target = $region32
      $region31: #{_cat_conv.1} parent=5 // pred_region
        %s145 = ssub.s32 %s12, 1
        %p146 = scmp.lt.s32.totalorder %s17, 1
        %s147 = scalar_select %p146, %s17, 1
        %s148 = smul.addr %s147, 32
        %s149 = smul.addr %s148, 4
        %s150 = scalar_lea.vmem %s0, %s149
        %p151 = pneg %p38
        %p152 = pneg %p35
        %p153 = pneg %p59
        %p154 = pneg %p56
        %p155 = pneg %p80
        %p156 = pneg %p77
        %p157 = pneg %p106
        %p158 = pneg %p103
        %s159 = sand.u32 %s93, 1
        %s160 = scalar_lea.sflag [#allocation4], %s159
        %s161 = sand.u32 %s93, 1
        %s162 = smul.addr %s161, 128
        %s163 = scalar_lea.vmem [#allocation3], %s162
        %p164 = scmp.lt.s32.totalorder %s17, 1
        %s165 = scalar_select %p164, %s17, 1
        %s166 = smul.addr %s165, 32
        %s167 = smul.addr %s166, 4
        %s168 = scalar_lea.vmem %s0, %s167
        %vm170 = vcmask 19456
        %171 = vst.msk [vmem:[#allocation2] sm:$0xf] %vm170, 0
        %172 = vst.msk [vmem:[#allocation2 + $0x4] sm:$0xf] %vm170, 0
        %vm173 = vcmask 16384
        %174 = vst.msk [vmem:[#allocation2 + $0x8] sm:$0x1] %vm173, 0
        %175 = vst.msk [vmem:[#allocation2 + $0xc] sm:$0xf] %vm170, 0
        %176 = vst.msk [vmem:[#allocation2 + $0x10] sm:$0xf] %vm170, 0
        %177 = vst.msk [vmem:[#allocation2 + $0x14] sm:$0x1] %vm173, 0
        %178 = vst.msk [vmem:[#allocation2 + $0x18] sm:$0xf] %vm170, 0
        %179 = vst.msk [vmem:[#allocation2 + $0x1c] sm:$0xf] %vm170, 0
        %180 = vst.msk [vmem:[#allocation2 + $0x20] sm:$0x1] %vm173, 0
        %181 = vst.msk [vmem:[#allocation2 + $0x24] sm:$0xf] %vm170, 0
        %182 = vst.msk [vmem:[#allocation2 + $0x28] sm:$0xf] %vm170, 0
        %183 = vst.msk [vmem:[#allocation2 + $0x2c] sm:$0x1] %vm173, 0
        %184 = vst.msk [vmem:[#allocation2 + $0x30] sm:$0xf] %vm170, 0
        %185 = vst.msk [vmem:[#allocation2 + $0x34] sm:$0xf] %vm170, 0
        %186 = vst.msk [vmem:[#allocation2 + $0x38] sm:$0x1] %vm173, 0
        %187 = vst.msk [vmem:[#allocation2 + $0x3c] sm:$0xf] %vm170, 0
        %188 = vst.msk [vmem:[#allocation2 + $0x40] sm:$0xf] %vm170, 0
        %189 = vst.msk [vmem:[#allocation2 + $0x44] sm:$0x1] %vm173, 0
        %190 = vst.msk [vmem:[#allocation2 + $0x48] sm:$0xf] %vm170, 0
        %191 = vst.msk [vmem:[#allocation2 + $0x4c] sm:$0xf] %vm170, 0
        %192 = vst.msk [vmem:[#allocation2 + $0x50] sm:$0x1] %vm173, 0
        %193 = vst.msk [vmem:[#allocation2 + $0x54] sm:$0xf] %vm170, 0
        %194 = vst.msk [vmem:[#allocation2 + $0x58] sm:$0xf] %vm170, 0
        %195 = vst.msk [vmem:[#allocation2 + $0x5c] sm:$0x1] %vm173, 0
        %196 = vst.msk [vmem:[#allocation2 + $0x60] sm:$0xf] %vm170, 0
        %197 = vst.msk [vmem:[#allocation2 + $0x64] sm:$0xf] %vm170, 0
        %198 = vst.msk [vmem:[#allocation2 + $0x68] sm:$0x1] %vm173, 0
        %199 = vst.msk [vmem:[#allocation2 + $0x6c] sm:$0xf] %vm170, 0
        %200 = vst.msk [vmem:[#allocation2 + $0x70] sm:$0xf] %vm170, 0
        %201 = vst.msk [vmem:[#allocation2 + $0x74] sm:$0x1] %vm173, 0
        %202 = vst.msk [vmem:[#allocation2 + $0x78] sm:$0xf] %vm170, 0
        %203 = vst.msk [vmem:[#allocation2 + $0x7c] sm:$0xf] %vm170, 0
        %204 = vst.msk [vmem:[#allocation2 + $0x80] sm:$0x1] %vm173, 0
        %205 = vst.msk [vmem:[#allocation2 + $0x84] sm:$0xf] %vm170, 0
        %206 = vst.msk [vmem:[#allocation2 + $0x88] sm:$0xf] %vm170, 0
        %207 = vst.msk [vmem:[#allocation2 + $0x8c] sm:$0x1] %vm173, 0
        %208 = vst.msk [vmem:[#allocation2 + $0x90] sm:$0xf] %vm170, 0
        %209 = vst.msk [vmem:[#allocation2 + $0x94] sm:$0xf] %vm170, 0
        %210 = vst.msk [vmem:[#allocation2 + $0x98] sm:$0x1] %vm173, 0
        %211 = vst.msk [vmem:[#allocation2 + $0x9c] sm:$0xf] %vm170, 0
        %212 = vst.msk [vmem:[#allocation2 + $0xa0] sm:$0xf] %vm170, 0
        %213 = vst.msk [vmem:[#allocation2 + $0xa4] sm:$0x1] %vm173, 0
        %214 = vst.msk [vmem:[#allocation2 + $0xa8] sm:$0xf] %vm170, 0
        %215 = vst.msk [vmem:[#allocation2 + $0xac] sm:$0xf] %vm170, 0
        %216 = vst.msk [vmem:[#allocation2 + $0xb0] sm:$0x1] %vm173, 0
        %217 = vst.msk [vmem:[#allocation2 + $0xb4] sm:$0xf] %vm170, 0
        %218 = vst.msk [vmem:[#allocation2 + $0xb8] sm:$0xf] %vm170, 0
        %219 = vst.msk [vmem:[#allocation2 + $0xbc] sm:$0x1] %vm173, 0
        %220 = vst.msk [vmem:[#allocation2 + $0xc0] sm:$0xf] %vm170, 0
        %221 = vst.msk [vmem:[#allocation2 + $0xc4] sm:$0xf] %vm170, 0
        %222 = vst.msk [vmem:[#allocation2 + $0xc8] sm:$0x1] %vm173, 0
        %223 = vst.msk [vmem:[#allocation2 + $0xcc] sm:$0xf] %vm170, 0
        %224 = vst.msk [vmem:[#allocation2 + $0xd0] sm:$0xf] %vm170, 0
        %225 = vst.msk [vmem:[#allocation2 + $0xd4] sm:$0x1] %vm173, 0
        %v226 = vld [vmem:[%s168] sm:$0xf]
        %v227 = vld [vmem:[%s168 + $0x4] sm:$0xf]
        %v228 = vld [vmem:[%s168 + $0x8] sm:$0xf]
        %v229 = vld [vmem:[%s168 + $0xc] sm:$0xf]
        %v230 = vld [vmem:[%s168 + $0x10] sm:$0xf]
        %v231 = vld [vmem:[%s168 + $0x14] sm:$0xf]
        %v232 = vld [vmem:[%s168 + $0x18] sm:$0xf]
        %v233 = vld [vmem:[%s168 + $0x1c] sm:$0xf]
        %v234 = vld [vmem:[%s168 + $0x20] sm:$0xf]
        %v235 = vld [vmem:[%s168 + $0x24] sm:$0xf]
        %v236 = vld [vmem:[%s168 + $0x28] sm:$0xf]
        %v237 = vld [vmem:[%s168 + $0x2c] sm:$0xf]
        %v238 = vld [vmem:[%s168 + $0x30] sm:$0xf]
        %v239 = vld [vmem:[%s168 + $0x34] sm:$0xf]
        %v240 = vld [vmem:[%s168 + $0x38] sm:$0xf]
        %v241 = vld [vmem:[%s168 + $0x3c] sm:$0xf]
        %v242 = vld [vmem:[%s168 + $0x40] sm:$0xf]
        %v243 = vld [vmem:[%s168 + $0x44] sm:$0xf]
        %v244 = vld [vmem:[%s168 + $0x48] sm:$0xf]
        %v245 = vld [vmem:[%s168 + $0x4c] sm:$0xf]
        %v246 = vld [vmem:[%s168 + $0x50] sm:$0xf]
        %v247 = vld [vmem:[%s168 + $0x54] sm:$0xf]
        %v248 = vld [vmem:[%s168 + $0x58] sm:$0xf]
        %v249 = vld [vmem:[%s168 + $0x5c] sm:$0xf]
        %v250 = vld [vmem:[%s168 + $0x60] sm:$0xf]
        %v251 = vld [vmem:[%s168 + $0x64] sm:$0xf]
        %v252 = vld [vmem:[%s168 + $0x68] sm:$0xf]
        %v253 = vld [vmem:[%s168 + $0x6c] sm:$0xf]
        %v254 = vld [vmem:[%s168 + $0x70] sm:$0xf]
        %v255 = vld [vmem:[%s168 + $0x74] sm:$0xf]
        %v256 = vld [vmem:[%s168 + $0x78] sm:$0xf]
        %v257 = vld [vmem:[%s168 + $0x7c] sm:$0xf]
        %vm258 = vsmask.f32 256
        %vm259 = vsmask.f32 4368
        %vm260 = vmor %vm258, %vm259
        %v262 = vshrl.u32 %v226, 16
        %v264 = vrot.slane %v262, 7
        %v265 = vshll.u32 %v226, 16
        %v267 = vor.u32 %v264, %v265
        %v268 = vrot.slane %v264, 4
        %v270 = vshrl.u32 %v227, 16
        %v272 = vrot.slane %v270, 7
        %v273 = vshll.u32 %v227, 16
        %v275 = vor.u32 %v272, %v273
        %v276 = vsel %vm260, %v268, %v275
        %v277 = vrot.slane %v272, 4
        %v279 = vshrl.u32 %v228, 16
        %v281 = vrot.slane %v279, 7
        %v282 = vshll.u32 %v228, 16
        %v284 = vor.u32 %v281, %v282
        %v285 = vrot.slane %v281, 4
        %v287 = vshrl.u32 %v229, 16
        %v289 = vrot.slane %v287, 7
        %v290 = vshll.u32 %v229, 16
        %v292 = vor.u32 %v289, %v290
        %v293 = vsel %vm260, %v285, %v292
        %v294 = vrot.slane %v289, 4
        %v296 = vshrl.u32 %v230, 16
        %v298 = vrot.slane %v296, 7
        %v299 = vshll.u32 %v230, 16
        %v301 = vor.u32 %v298, %v299
        %v302 = vrot.slane %v298, 4
        %v304 = vshrl.u32 %v231, 16
        %v306 = vrot.slane %v304, 7
        %v307 = vshll.u32 %v231, 16
        %v309 = vor.u32 %v306, %v307
        %v310 = vsel %vm260, %v302, %v309
        %v311 = vrot.slane %v306, 4
        %v313 = vshrl.u32 %v232, 16
        %v315 = vrot.slane %v313, 7
        %v316 = vshll.u32 %v232, 16
        %v318 = vor.u32 %v315, %v316
        %v319 = vrot.slane %v315, 4
        %v321 = vshrl.u32 %v233, 16
        %v323 = vrot.slane %v321, 7
        %v324 = vshll.u32 %v233, 16
        %v326 = vor.u32 %v323, %v324
        %v327 = vsel %vm260, %v319, %v326
        %v328 = vrot.slane %v323, 4
        %v330 = vshrl.u32 %v234, 16
        %v332 = vrot.slane %v330, 7
        %v333 = vshll.u32 %v234, 16
        %v335 = vor.u32 %v332, %v333
        %v336 = vrot.slane %v332, 4
        %v338 = vshrl.u32 %v235, 16
        %v340 = vrot.slane %v338, 7
        %v341 = vshll.u32 %v235, 16
        %v343 = vor.u32 %v340, %v341
        %v344 = vsel %vm260, %v336, %v343
        %v345 = vrot.slane %v340, 4
        %v347 = vshrl.u32 %v236, 16
        %v349 = vrot.slane %v347, 7
        %v350 = vshll.u32 %v236, 16
        %v352 = vor.u32 %v349, %v350
        %v353 = vrot.slane %v349, 4
        %v355 = vshrl.u32 %v237, 16
        %v357 = vrot.slane %v355, 7
        %v358 = vshll.u32 %v237, 16
        %v360 = vor.u32 %v357, %v358
        %v361 = vsel %vm260, %v353, %v360
        %v362 = vrot.slane %v357, 4
        %v364 = vshrl.u32 %v238, 16
        %v366 = vrot.slane %v364, 7
        %v367 = vshll.u32 %v238, 16
        %v369 = vor.u32 %v366, %v367
        %v370 = vrot.slane %v366, 4
        %v372 = vshrl.u32 %v239, 16
        %v374 = vrot.slane %v372, 7
        %v375 = vshll.u32 %v239, 16
        %v377 = vor.u32 %v374, %v375
        %v378 = vsel %vm260, %v370, %v377
        %v379 = vrot.slane %v374, 4
        %v381 = vshrl.u32 %v240, 16
        %v383 = vrot.slane %v381, 7
        %v384 = vshll.u32 %v240, 16
        %v386 = vor.u32 %v383, %v384
        %v387 = vrot.slane %v383, 4
        %v389 = vshrl.u32 %v241, 16
        %v391 = vrot.slane %v389, 7
        %v392 = vshll.u32 %v241, 16
        %v394 = vor.u32 %v391, %v392
        %v395 = vsel %vm260, %v387, %v394
        %v396 = vrot.slane %v391, 4
        %v398 = vshrl.u32 %v242, 16
        %v400 = vrot.slane %v398, 7
        %v401 = vshll.u32 %v242, 16
        %v403 = vor.u32 %v400, %v401
        %v404 = vrot.slane %v400, 4
        %v406 = vshrl.u32 %v243, 16
        %v408 = vrot.slane %v406, 7
        %v409 = vshll.u32 %v243, 16
        %v411 = vor.u32 %v408, %v409
        %v412 = vsel %vm260, %v404, %v411
        %v413 = vrot.slane %v408, 4
        %v415 = vshrl.u32 %v244, 16
        %v417 = vrot.slane %v415, 7
        %v418 = vshll.u32 %v244, 16
        %v420 = vor.u32 %v417, %v418
        %v421 = vrot.slane %v417, 4
        %v423 = vshrl.u32 %v245, 16
        %v425 = vrot.slane %v423, 7
        %v426 = vshll.u32 %v245, 16
        %v428 = vor.u32 %v425, %v426
        %v429 = vsel %vm260, %v421, %v428
        %v430 = vrot.slane %v425, 4
        %v432 = vshrl.u32 %v246, 16
        %v434 = vrot.slane %v432, 7
        %v435 = vshll.u32 %v246, 16
        %v437 = vor.u32 %v434, %v435
        %v438 = vrot.slane %v434, 4
        %v440 = vshrl.u32 %v247, 16
        %v442 = vrot.slane %v440, 7
        %v443 = vshll.u32 %v247, 16
        %v445 = vor.u32 %v442, %v443
        %v446 = vsel %vm260, %v438, %v445
        %v447 = vrot.slane %v442, 4
        %v449 = vshrl.u32 %v248, 16
        %v451 = vrot.slane %v449, 7
        %v452 = vshll.u32 %v248, 16
        %v454 = vor.u32 %v451, %v452
        %v455 = vrot.slane %v451, 4
        %v457 = vshrl.u32 %v249, 16
        %v459 = vrot.slane %v457, 7
        %v460 = vshll.u32 %v249, 16
        %v462 = vor.u32 %v459, %v460
        %v463 = vsel %vm260, %v455, %v462
        %v464 = vrot.slane %v459, 4
        %v466 = vshrl.u32 %v250, 16
        %v468 = vrot.slane %v466, 7
        %v469 = vshll.u32 %v250, 16
        %v471 = vor.u32 %v468, %v469
        %v472 = vrot.slane %v468, 4
        %v474 = vshrl.u32 %v251, 16
        %v476 = vrot.slane %v474, 7
        %v477 = vshll.u32 %v251, 16
        %v479 = vor.u32 %v476, %v477
        %v480 = vsel %vm260, %v472, %v479
        %v481 = vrot.slane %v476, 4
        %v483 = vshrl.u32 %v252, 16
        %v485 = vrot.slane %v483, 7
        %v486 = vshll.u32 %v252, 16
        %v488 = vor.u32 %v485, %v486
        %v489 = vrot.slane %v485, 4
        %v491 = vshrl.u32 %v253, 16
        %v493 = vrot.slane %v491, 7
        %v494 = vshll.u32 %v253, 16
        %v496 = vor.u32 %v493, %v494
        %v497 = vsel %vm260, %v489, %v496
        %v498 = vrot.slane %v493, 4
        %v500 = vshrl.u32 %v254, 16
        %v502 = vrot.slane %v500, 7
        %v503 = vshll.u32 %v254, 16
        %v505 = vor.u32 %v502, %v503
        %v506 = vrot.slane %v502, 4
        %v508 = vshrl.u32 %v255, 16
        %v510 = vrot.slane %v508, 7
        %v511 = vshll.u32 %v255, 16
        %v513 = vor.u32 %v510, %v511
        %v514 = vsel %vm260, %v506, %v513
        %v515 = vrot.slane %v510, 4
        %v517 = vshrl.u32 %v256, 16
        %v519 = vrot.slane %v517, 7
        %v520 = vshll.u32 %v256, 16
        %v522 = vor.u32 %v519, %v520
        %v523 = vrot.slane %v519, 4
        %v525 = vshrl.u32 %v257, 16
        %v527 = vrot.slane %v525, 7
        %v528 = vshll.u32 %v257, 16
        %v530 = vor.u32 %v527, %v528
        %v531 = vsel %vm260, %v523, %v530
        %v532 = vrot.slane %v527, 4
        %s581 = scalar_lea.vmem [#allocation2], 12
        %vm582 = vcmask 19456
        %vm583 = vsmask.f32 7938
        %vm584 = vmand %vm582, %vm583
        %v585 = vld [vmem:[%s581] sm:$0xf]
        %v586 = vsel %vm584, %v267, %v585
        %587 = vst [vmem:[%s581] sm:$0xf] %v586
        %588 = vst.msk [vmem:[%s581 + $0x4] sm:$0xf] %vm170, %v276
        %vm589 = vcmask 16384
        %vm590 = vmand %vm589, %vm258
        %v591 = vld [vmem:[%s581 + $0x8] sm:$0x1]
        %v592 = vsel %vm590, %v277, %v591
        %593 = vst [vmem:[%s581 + $0x8] sm:$0x1] %v592
        %v594 = vld [vmem:[%s581 + $0xc] sm:$0xf]
        %v595 = vsel %vm584, %v284, %v594
        %596 = vst [vmem:[%s581 + $0xc] sm:$0xf] %v595
        %597 = vst.msk [vmem:[%s581 + $0x10] sm:$0xf] %vm170, %v293
        %v598 = vld [vmem:[%s581 + $0x14] sm:$0x1]
        %v599 = vsel %vm590, %v294, %v598
        %600 = vst [vmem:[%s581 + $0x14] sm:$0x1] %v599
        %v601 = vld [vmem:[%s581 + $0x18] sm:$0xf]
        %v602 = vsel %vm584, %v301, %v601
        %603 = vst [vmem:[%s581 + $0x18] sm:$0xf] %v602
        %604 = vst.msk [vmem:[%s581 + $0x1c] sm:$0xf] %vm170, %v310
        %v605 = vld [vmem:[%s581 + $0x20] sm:$0x1]
        %v606 = vsel %vm590, %v311, %v605
        %607 = vst [vmem:[%s581 + $0x20] sm:$0x1] %v606
        %v608 = vld [vmem:[%s581 + $0x24] sm:$0xf]
        %v609 = vsel %vm584, %v318, %v608
        %610 = vst [vmem:[%s581 + $0x24] sm:$0xf] %v609
        %611 = vst.msk [vmem:[%s581 + $0x28] sm:$0xf] %vm170, %v327
        %v612 = vld [vmem:[%s581 + $0x2c] sm:$0x1]
        %v613 = vsel %vm590, %v328, %v612
        %614 = vst [vmem:[%s581 + $0x2c] sm:$0x1] %v613
        %v615 = vld [vmem:[%s581 + $0x30] sm:$0xf]
        %v616 = vsel %vm584, %v335, %v615
        %617 = vst [vmem:[%s581 + $0x30] sm:$0xf] %v616
        %618 = vst.msk [vmem:[%s581 + $0x34] sm:$0xf] %vm170, %v344
        %v619 = vld [vmem:[%s581 + $0x38] sm:$0x1]
        %v620 = vsel %vm590, %v345, %v619
        %621 = vst [vmem:[%s581 + $0x38] sm:$0x1] %v620
        %v622 = vld [vmem:[%s581 + $0x3c] sm:$0xf]
        %v623 = vsel %vm584, %v352, %v622
        %624 = vst [vmem:[%s581 + $0x3c] sm:$0xf] %v623
        %625 = vst.msk [vmem:[%s581 + $0x40] sm:$0xf] %vm170, %v361
        %v626 = vld [vmem:[%s581 + $0x44] sm:$0x1]
        %v627 = vsel %vm590, %v362, %v626
        %628 = vst [vmem:[%s581 + $0x44] sm:$0x1] %v627
        %v629 = vld [vmem:[%s581 + $0x48] sm:$0xf]
        %v630 = vsel %vm584, %v369, %v629
        %631 = vst [vmem:[%s581 + $0x48] sm:$0xf] %v630
        %632 = vst.msk [vmem:[%s581 + $0x4c] sm:$0xf] %vm170, %v378
        %v633 = vld [vmem:[%s581 + $0x50] sm:$0x1]
        %v634 = vsel %vm590, %v379, %v633
        %635 = vst [vmem:[%s581 + $0x50] sm:$0x1] %v634
        %v636 = vld [vmem:[%s581 + $0x54] sm:$0xf]
        %v637 = vsel %vm584, %v386, %v636
        %638 = vst [vmem:[%s581 + $0x54] sm:$0xf] %v637
        %639 = vst.msk [vmem:[%s581 + $0x58] sm:$0xf] %vm170, %v395
        %v640 = vld [vmem:[%s581 + $0x5c] sm:$0x1]
        %v641 = vsel %vm590, %v396, %v640
        %642 = vst [vmem:[%s581 + $0x5c] sm:$0x1] %v641
        %v643 = vld [vmem:[%s581 + $0x60] sm:$0xf]
        %v644 = vsel %vm584, %v403, %v643
        %645 = vst [vmem:[%s581 + $0x60] sm:$0xf] %v644
        %646 = vst.msk [vmem:[%s581 + $0x64] sm:$0xf] %vm170, %v412
        %v647 = vld [vmem:[%s581 + $0x68] sm:$0x1]
        %v648 = vsel %vm590, %v413, %v647
        %649 = vst [vmem:[%s581 + $0x68] sm:$0x1] %v648
        %v650 = vld [vmem:[%s581 + $0x6c] sm:$0xf]
        %v651 = vsel %vm584, %v420, %v650
        %652 = vst [vmem:[%s581 + $0x6c] sm:$0xf] %v651
        %653 = vst.msk [vmem:[%s581 + $0x70] sm:$0xf] %vm170, %v429
        %v654 = vld [vmem:[%s581 + $0x74] sm:$0x1]
        %v655 = vsel %vm590, %v430, %v654
        %656 = vst [vmem:[%s581 + $0x74] sm:$0x1] %v655
        %v657 = vld [vmem:[%s581 + $0x78] sm:$0xf]
        %v658 = vsel %vm584, %v437, %v657
        %659 = vst [vmem:[%s581 + $0x78] sm:$0xf] %v658
        %660 = vst.msk [vmem:[%s581 + $0x7c] sm:$0xf] %vm170, %v446
        %v661 = vld [vmem:[%s581 + $0x80] sm:$0x1]
        %v662 = vsel %vm590, %v447, %v661
        %663 = vst [vmem:[%s581 + $0x80] sm:$0x1] %v662
        %v664 = vld [vmem:[%s581 + $0x84] sm:$0xf]
        %v665 = vsel %vm584, %v454, %v664
        %666 = vst [vmem:[%s581 + $0x84] sm:$0xf] %v665
        %667 = vst.msk [vmem:[%s581 + $0x88] sm:$0xf] %vm170, %v463
        %v668 = vld [vmem:[%s581 + $0x8c] sm:$0x1]
        %v669 = vsel %vm590, %v464, %v668
        %670 = vst [vmem:[%s581 + $0x8c] sm:$0x1] %v669
        %v671 = vld [vmem:[%s581 + $0x90] sm:$0xf]
        %v672 = vsel %vm584, %v471, %v671
        %673 = vst [vmem:[%s581 + $0x90] sm:$0xf] %v672
        %674 = vst.msk [vmem:[%s581 + $0x94] sm:$0xf] %vm170, %v480
        %v675 = vld [vmem:[%s581 + $0x98] sm:$0x1]
        %v676 = vsel %vm590, %v481, %v675
        %677 = vst [vmem:[%s581 + $0x98] sm:$0x1] %v676
        %v678 = vld [vmem:[%s581 + $0x9c] sm:$0xf]
        %v679 = vsel %vm584, %v488, %v678
        %680 = vst [vmem:[%s581 + $0x9c] sm:$0xf] %v679
        %681 = vst.msk [vmem:[%s581 + $0xa0] sm:$0xf] %vm170, %v497
        %v682 = vld [vmem:[%s581 + $0xa4] sm:$0x1]
        %v683 = vsel %vm590, %v498, %v682
        %684 = vst [vmem:[%s581 + $0xa4] sm:$0x1] %v683
        %v685 = vld [vmem:[%s581 + $0xa8] sm:$0xf]
        %v686 = vsel %vm584, %v505, %v685
        %687 = vst [vmem:[%s581 + $0xa8] sm:$0xf] %v686
        %688 = vst.msk [vmem:[%s581 + $0xac] sm:$0xf] %vm170, %v514
        %v689 = vld [vmem:[%s581 + $0xb0] sm:$0x1]
        %v690 = vsel %vm590, %v515, %v689
        %691 = vst [vmem:[%s581 + $0xb0] sm:$0x1] %v690
        %v692 = vld [vmem:[%s581 + $0xb4] sm:$0xf]
        %v693 = vsel %vm584, %v522, %v692
        %694 = vst [vmem:[%s581 + $0xb4] sm:$0xf] %v693
        %695 = vst.msk [vmem:[%s581 + $0xb8] sm:$0xf] %vm170, %v531
        %v696 = vld [vmem:[%s581 + $0xbc] sm:$0x1]
        %v697 = vsel %vm590, %v532, %v696
        %698 = vst [vmem:[%s581 + $0xbc] sm:$0x1] %v697
        %v699 = vld [vmem:[#allocation2] sm:$0xf]
        %v700 = vld [vmem:[#allocation2 + $0x4] sm:$0xf]
        %v701 = vld [vmem:[#allocation2 + $0x8] sm:$0x1]
        %v702 = vld [vmem:[#allocation2 + $0xc] sm:$0xf]
        %v703 = vld [vmem:[#allocation2 + $0x10] sm:$0xf]
        %v704 = vld [vmem:[#allocation2 + $0x14] sm:$0x1]
        %v705 = vld [vmem:[#allocation2 + $0x18] sm:$0xf]
        %v706 = vld [vmem:[#allocation2 + $0x1c] sm:$0xf]
        %v707 = vld [vmem:[#allocation2 + $0x20] sm:$0x1]
        %v708 = vld [vmem:[#allocation2 + $0x24] sm:$0xf]
        %v709 = vld [vmem:[#allocation2 + $0x28] sm:$0xf]
        %v710 = vld [vmem:[#allocation2 + $0x2c] sm:$0x1]
        %v711 = vld [vmem:[#allocation2 + $0x30] sm:$0xf]
        %v712 = vld [vmem:[#allocation2 + $0x34] sm:$0xf]
        %v713 = vld [vmem:[#allocation2 + $0x38] sm:$0x1]
        %v714 = vld [vmem:[#allocation2 + $0x3c] sm:$0xf]
        %v715 = vld [vmem:[#allocation2 + $0x40] sm:$0xf]
        %v716 = vld [vmem:[#allocation2 + $0x44] sm:$0x1]
        %v717 = vld [vmem:[#allocation2 + $0x48] sm:$0xf]
        %v718 = vld [vmem:[#allocation2 + $0x4c] sm:$0xf]
        %v719 = vld [vmem:[#allocation2 + $0x50] sm:$0x1]
        %v720 = vld [vmem:[#allocation2 + $0x54] sm:$0xf]
        %v721 = vld [vmem:[#allocation2 + $0x58] sm:$0xf]
        %v722 = vld [vmem:[#allocation2 + $0x5c] sm:$0x1]
        %v723 = vld [vmem:[#allocation2 + $0x60] sm:$0xf]
        %v724 = vld [vmem:[#allocation2 + $0x64] sm:$0xf]
        %v725 = vld [vmem:[#allocation2 + $0x68] sm:$0x1]
        %v726 = vld [vmem:[#allocation2 + $0x6c] sm:$0xf]
        %v727 = vld [vmem:[#allocation2 + $0x70] sm:$0xf]
        %v728 = vld [vmem:[#allocation2 + $0x74] sm:$0x1]
        %v729 = vld [vmem:[#allocation2 + $0x78] sm:$0xf]
        %v730 = vld [vmem:[#allocation2 + $0x7c] sm:$0xf]
        %v731 = vld [vmem:[#allocation2 + $0x80] sm:$0x1]
        %v732 = vld [vmem:[#allocation2 + $0x84] sm:$0xf]
        %v733 = vld [vmem:[#allocation2 + $0x88] sm:$0xf]
        %v734 = vld [vmem:[#allocation2 + $0x8c] sm:$0x1]
        %v735 = vld [vmem:[#allocation2 + $0x90] sm:$0xf]
        %v736 = vld [vmem:[#allocation2 + $0x94] sm:$0xf]
        %v737 = vld [vmem:[#allocation2 + $0x98] sm:$0x1]
        %v738 = vld [vmem:[#allocation2 + $0x9c] sm:$0xf]
        %v739 = vld [vmem:[#allocation2 + $0xa0] sm:$0xf]
        %v740 = vld [vmem:[#allocation2 + $0xa4] sm:$0x1]
        %v741 = vld [vmem:[#allocation2 + $0xa8] sm:$0xf]
        %v742 = vld [vmem:[#allocation2 + $0xac] sm:$0xf]
        %v743 = vld [vmem:[#allocation2 + $0xb0] sm:$0x1]
        %v744 = vld [vmem:[#allocation2 + $0xb4] sm:$0xf]
        %v745 = vld [vmem:[#allocation2 + $0xb8] sm:$0xf]
        %v746 = vld [vmem:[#allocation2 + $0xbc] sm:$0x1]
        %v747 = vld [vmem:[#allocation2 + $0xc0] sm:$0xf]
        %v748 = vld [vmem:[#allocation2 + $0xc4] sm:$0xf]
        %v749 = vld [vmem:[#allocation2 + $0xc8] sm:$0x1]
        %v750 = vld [vmem:[#allocation2 + $0xcc] sm:$0xf]
        %v751 = vld [vmem:[#allocation2 + $0xd0] sm:$0xf]
        %v752 = vld [vmem:[#allocation2 + $0xd4] sm:$0x1]
        %v753 = vld [vmem:[%s1] sm:$0x3]
        %vm754 = vsmask.f32 3328
        %vm755 = vsmask.f32 7440
        %vm756 = vmor %vm754, %vm755
        %v758 = vshrl.u32 %v699, 16
        %v760 = vrot.slane %v758, 4
        %v761 = vshll.u32 %v699, 16
        %v763 = vrot.slane %v761, 5
        %v764 = vor.u32 %v760, %v763
        %v765 = vrot.slane %v764, 4
        %v767 = vshll.u32 %v700, 16
        %v769 = vrot.slane %v767, 5
        %v770 = vsel %vm756, %v765, %v769
        %v771 = vshrl.u32 %v700, 16
        %v773 = vrot.slane %v771, 4
        %v774 = vor.u32 %v773, %v769
        %v775 = vrot.slane %v774, 4
        %v777 = vshll.u32 %v701, 16
        %v779 = vrot.slane %v777, 5
        %v780 = vsel %vm756, %v775, %v779
        %v782 = vshrl.u32 %v702, 16
        %v784 = vrot.slane %v782, 4
        %v785 = vshll.u32 %v702, 16
        %v787 = vrot.slane %v785, 5
        %v788 = vor.u32 %v784, %v787
        %v789 = vrot.slane %v788, 4
        %v791 = vshll.u32 %v703, 16
        %v793 = vrot.slane %v791, 5
        %v794 = vsel %vm756, %v789, %v793
        %v795 = vshrl.u32 %v703, 16
        %v797 = vrot.slane %v795, 4
        %v798 = vor.u32 %v797, %v793
        %v799 = vrot.slane %v798, 4
        %v801 = vshll.u32 %v704, 16
        %v803 = vrot.slane %v801, 5
        %v804 = vsel %vm756, %v799, %v803
        %v806 = vshrl.u32 %v705, 16
        %v808 = vrot.slane %v806, 4
        %v809 = vshll.u32 %v705, 16
        %v811 = vrot.slane %v809, 5
        %v812 = vor.u32 %v808, %v811
        %v813 = vrot.slane %v812, 4
        %v815 = vshll.u32 %v706, 16
        %v817 = vrot.slane %v815, 5
        %v818 = vsel %vm756, %v813, %v817
        %v819 = vshrl.u32 %v706, 16
        %v821 = vrot.slane %v819, 4
        %v822 = vor.u32 %v821, %v817
        %v823 = vrot.slane %v822, 4
        %v825 = vshll.u32 %v707, 16
        %v827 = vrot.slane %v825, 5
        %v828 = vsel %vm756, %v823, %v827
        %v830 = vshrl.u32 %v708, 16
        %v832 = vrot.slane %v830, 4
        %v833 = vshll.u32 %v708, 16
        %v835 = vrot.slane %v833, 5
        %v836 = vor.u32 %v832, %v835
        %v837 = vrot.slane %v836, 4
        %v839 = vshll.u32 %v709, 16
        %v841 = vrot.slane %v839, 5
        %v842 = vsel %vm756, %v837, %v841
        %v843 = vshrl.u32 %v709, 16
        %v845 = vrot.slane %v843, 4
        %v846 = vor.u32 %v845, %v841
        %v847 = vrot.slane %v846, 4
        %v849 = vshll.u32 %v710, 16
        %v851 = vrot.slane %v849, 5
        %v852 = vsel %vm756, %v847, %v851
        %v854 = vshrl.u32 %v711, 16
        %v856 = vrot.slane %v854, 4
        %v857 = vshll.u32 %v711, 16
        %v859 = vrot.slane %v857, 5
        %v860 = vor.u32 %v856, %v859
        %v861 = vrot.slane %v860, 4
        %v863 = vshll.u32 %v712, 16
        %v865 = vrot.slane %v863, 5
        %v866 = vsel %vm756, %v861, %v865
        %v867 = vshrl.u32 %v712, 16
        %v869 = vrot.slane %v867, 4
        %v870 = vor.u32 %v869, %v865
        %v871 = vrot.slane %v870, 4
        %v873 = vshll.u32 %v713, 16
        %v875 = vrot.slane %v873, 5
        %v876 = vsel %vm756, %v871, %v875
        %v878 = vshrl.u32 %v714, 16
        %v880 = vrot.slane %v878, 4
        %v881 = vshll.u32 %v714, 16
        %v883 = vrot.slane %v881, 5
        %v884 = vor.u32 %v880, %v883
        %v885 = vrot.slane %v884, 4
        %v887 = vshll.u32 %v715, 16
        %v889 = vrot.slane %v887, 5
        %v890 = vsel %vm756, %v885, %v889
        %v891 = vshrl.u32 %v715, 16
        %v893 = vrot.slane %v891, 4
        %v894 = vor.u32 %v893, %v889
        %v895 = vrot.slane %v894, 4
        %v897 = vshll.u32 %v716, 16
        %v899 = vrot.slane %v897, 5
        %v900 = vsel %vm756, %v895, %v899
        %v902 = vshrl.u32 %v717, 16
        %v904 = vrot.slane %v902, 4
        %v905 = vshll.u32 %v717, 16
        %v907 = vrot.slane %v905, 5
        %v908 = vor.u32 %v904, %v907
        %v909 = vrot.slane %v908, 4
        %v911 = vshll.u32 %v718, 16
        %v913 = vrot.slane %v911, 5
        %v914 = vsel %vm756, %v909, %v913
        %v915 = vshrl.u32 %v718, 16
        %v917 = vrot.slane %v915, 4
        %v918 = vor.u32 %v917, %v913
        %v919 = vrot.slane %v918, 4
        %v921 = vshll.u32 %v719, 16
        %v923 = vrot.slane %v921, 5
        %v924 = vsel %vm756, %v919, %v923
        %v926 = vshrl.u32 %v720, 16
        %v928 = vrot.slane %v926, 4
        %v929 = vshll.u32 %v720, 16
        %v931 = vrot.slane %v929, 5
        %v932 = vor.u32 %v928, %v931
        %v933 = vrot.slane %v932, 4
        %v935 = vshll.u32 %v721, 16
        %v937 = vrot.slane %v935, 5
        %v938 = vsel %vm756, %v933, %v937
        %v939 = vshrl.u32 %v721, 16
        %v941 = vrot.slane %v939, 4
        %v942 = vor.u32 %v941, %v937
        %v943 = vrot.slane %v942, 4
        %v945 = vshll.u32 %v722, 16
        %v947 = vrot.slane %v945, 5
        %v948 = vsel %vm756, %v943, %v947
        %v950 = vshrl.u32 %v723, 16
        %v952 = vrot.slane %v950, 4
        %v953 = vshll.u32 %v723, 16
        %v955 = vrot.slane %v953, 5
        %v956 = vor.u32 %v952, %v955
        %v957 = vrot.slane %v956, 4
        %v959 = vshll.u32 %v724, 16
        %v961 = vrot.slane %v959, 5
        %v962 = vsel %vm756, %v957, %v961
        %v963 = vshrl.u32 %v724, 16
        %v965 = vrot.slane %v963, 4
        %v966 = vor.u32 %v965, %v961
        %v967 = vrot.slane %v966, 4
        %v969 = vshll.u32 %v725, 16
        %v971 = vrot.slane %v969, 5
        %v972 = vsel %vm756, %v967, %v971
        %v974 = vshrl.u32 %v726, 16
        %v976 = vrot.slane %v974, 4
        %v977 = vshll.u32 %v726, 16
        %v979 = vrot.slane %v977, 5
        %v980 = vor.u32 %v976, %v979
        %v981 = vrot.slane %v980, 4
        %v983 = vshll.u32 %v727, 16
        %v985 = vrot.slane %v983, 5
        %v986 = vsel %vm756, %v981, %v985
        %v987 = vshrl.u32 %v727, 16
        %v989 = vrot.slane %v987, 4
        %v990 = vor.u32 %v989, %v985
        %v991 = vrot.slane %v990, 4
        %v993 = vshll.u32 %v728, 16
        %v995 = vrot.slane %v993, 5
        %v996 = vsel %vm756, %v991, %v995
        %v998 = vshrl.u32 %v729, 16
        %v1000 = vrot.slane %v998, 4
        %v1001 = vshll.u32 %v729, 16
        %v1003 = vrot.slane %v1001, 5
        %v1004 = vor.u32 %v1000, %v1003
        %v1005 = vrot.slane %v1004, 4
        %v1007 = vshll.u32 %v730, 16
        %v1009 = vrot.slane %v1007, 5
        %v1010 = vsel %vm756, %v1005, %v1009
        %v1011 = vshrl.u32 %v730, 16
        %v1013 = vrot.slane %v1011, 4
        %v1014 = vor.u32 %v1013, %v1009
        %v1015 = vrot.slane %v1014, 4
        %v1017 = vshll.u32 %v731, 16
        %v1019 = vrot.slane %v1017, 5
        %v1020 = vsel %vm756, %v1015, %v1019
        %v1022 = vshrl.u32 %v732, 16
        %v1024 = vrot.slane %v1022, 4
        %v1025 = vshll.u32 %v732, 16
        %v1027 = vrot.slane %v1025, 5
        %v1028 = vor.u32 %v1024, %v1027
        %v1029 = vrot.slane %v1028, 4
        %v1031 = vshll.u32 %v733, 16
        %v1033 = vrot.slane %v1031, 5
        %v1034 = vsel %vm756, %v1029, %v1033
        %v1035 = vshrl.u32 %v733, 16
        %v1037 = vrot.slane %v1035, 4
        %v1038 = vor.u32 %v1037, %v1033
        %v1039 = vrot.slane %v1038, 4
        %v1041 = vshll.u32 %v734, 16
        %v1043 = vrot.slane %v1041, 5
        %v1044 = vsel %vm756, %v1039, %v1043
        %v1046 = vshrl.u32 %v735, 16
        %v1048 = vrot.slane %v1046, 4
        %v1049 = vshll.u32 %v735, 16
        %v1051 = vrot.slane %v1049, 5
        %v1052 = vor.u32 %v1048, %v1051
        %v1053 = vrot.slane %v1052, 4
        %v1055 = vshll.u32 %v736, 16
        %v1057 = vrot.slane %v1055, 5
        %v1058 = vsel %vm756, %v1053, %v1057
        %v1059 = vshrl.u32 %v736, 16
        %v1061 = vrot.slane %v1059, 4
        %v1062 = vor.u32 %v1061, %v1057
        %v1063 = vrot.slane %v1062, 4
        %v1065 = vshll.u32 %v737, 16
        %v1067 = vrot.slane %v1065, 5
        %v1068 = vsel %vm756, %v1063, %v1067
        %v1070 = vshrl.u32 %v738, 16
        %v1072 = vrot.slane %v1070, 4
        %v1073 = vshll.u32 %v738, 16
        %v1075 = vrot.slane %v1073, 5
        %v1076 = vor.u32 %v1072, %v1075
        %v1077 = vrot.slane %v1076, 4
        %v1079 = vshll.u32 %v739, 16
        %v1081 = vrot.slane %v1079, 5
        %v1082 = vsel %vm756, %v1077, %v1081
        %v1083 = vshrl.u32 %v739, 16
        %v1085 = vrot.slane %v1083, 4
        %v1086 = vor.u32 %v1085, %v1081
        %v1087 = vrot.slane %v1086, 4
        %v1089 = vshll.u32 %v740, 16
        %v1091 = vrot.slane %v1089, 5
        %v1092 = vsel %vm756, %v1087, %v1091
        %v1094 = vshrl.u32 %v741, 16
        %v1096 = vrot.slane %v1094, 4
        %v1097 = vshll.u32 %v741, 16
        %v1099 = vrot.slane %v1097, 5
        %v1100 = vor.u32 %v1096, %v1099
        %v1101 = vrot.slane %v1100, 4
        %v1103 = vshll.u32 %v742, 16
        %v1105 = vrot.slane %v1103, 5
        %v1106 = vsel %vm756, %v1101, %v1105
        %v1107 = vshrl.u32 %v742, 16
        %v1109 = vrot.slane %v1107, 4
        %v1110 = vor.u32 %v1109, %v1105
        %v1111 = vrot.slane %v1110, 4
        %v1113 = vshll.u32 %v743, 16
        %v1115 = vrot.slane %v1113, 5
        %v1116 = vsel %vm756, %v1111, %v1115
        %v1118 = vshrl.u32 %v744, 16
        %v1120 = vrot.slane %v1118, 4
        %v1121 = vshll.u32 %v744, 16
        %v1123 = vrot.slane %v1121, 5
        %v1124 = vor.u32 %v1120, %v1123
        %v1125 = vrot.slane %v1124, 4
        %v1127 = vshll.u32 %v745, 16
        %v1129 = vrot.slane %v1127, 5
        %v1130 = vsel %vm756, %v1125, %v1129
        %v1131 = vshrl.u32 %v745, 16
        %v1133 = vrot.slane %v1131, 4
        %v1134 = vor.u32 %v1133, %v1129
        %v1135 = vrot.slane %v1134, 4
        %v1137 = vshll.u32 %v746, 16
        %v1139 = vrot.slane %v1137, 5
        %v1140 = vsel %vm756, %v1135, %v1139
        %s1141 = scalar_lea.vmem %s1, 2
        %v1142 = vld [vmem:[%s1141] sm:$0x3]
        %v1143 = vunpack.c.l.b16 %v770
        %v1144 = vunpack.c.l.b16 %v780
        %v1145 = vunpack.c.l.b16 %v794
        %v1146 = vunpack.c.l.b16 %v804
        %v1147 = vunpack.c.l.b16 %v818
        %v1148 = vunpack.c.l.b16 %v828
        %v1149 = vunpack.c.l.b16 %v842
        %v1150 = vunpack.c.l.b16 %v852
        %v1151 = vunpack.c.l.b16 %v866
        %v1152 = vunpack.c.l.b16 %v876
        %v1153 = vunpack.c.l.b16 %v890
        %v1154 = vunpack.c.l.b16 %v900
        %v1155 = vunpack.c.l.b16 %v914
        %v1156 = vunpack.c.l.b16 %v924
        %v1157 = vunpack.c.l.b16 %v938
        %v1158 = vunpack.c.l.b16 %v948
        %v1159 = vunpack.c.l.b16 %v962
        %v1160 = vunpack.c.l.b16 %v972
        %v1161 = vunpack.c.l.b16 %v986
        %v1162 = vunpack.c.l.b16 %v996
        %v1163 = vunpack.c.l.b16 %v1010
        %v1164 = vunpack.c.l.b16 %v1020
        %v1165 = vunpack.c.l.b16 %v1034
        %v1166 = vunpack.c.l.b16 %v1044
        %v1167 = vunpack.c.l.b16 %v1058
        %v1168 = vunpack.c.l.b16 %v1068
        %v1169 = vunpack.c.l.b16 %v1082
        %v1170 = vunpack.c.l.b16 %v1092
        %v1171 = vunpack.c.l.b16 %v1106
        %v1172 = vunpack.c.l.b16 %v1116
        %v1173 = vunpack.c.l.b16 %v1130
        %v1174 = vunpack.c.l.b16 %v1140
        %v1175 = vpack.c.b16 %v1144, %v1143
        %v1176 = vpack.c.b16 %v1146, %v1145
        %v1177 = vpack.c.b16 %v1148, %v1147
        %v1178 = vpack.c.b16 %v1150, %v1149
        %v1179 = vpack.c.b16 %v1152, %v1151
        %v1180 = vpack.c.b16 %v1154, %v1153
        %v1181 = vpack.c.b16 %v1156, %v1155
        %v1182 = vpack.c.b16 %v1158, %v1157
        %v1183 = vpack.c.b16 %v1160, %v1159
        %v1184 = vpack.c.b16 %v1162, %v1161
        %v1185 = vpack.c.b16 %v1164, %v1163
        %v1186 = vpack.c.b16 %v1166, %v1165
        %v1187 = vpack.c.b16 %v1168, %v1167
        %v1188 = vpack.c.b16 %v1170, %v1169
        %v1189 = vpack.c.b16 %v1172, %v1171
        %v1190 = vpack.c.b16 %v1174, %v1173
        %vm1191 = vcmask 23552
        %v1193 = vsel %vm1191, %v1175, 0
        %v1196 = vsel %vm1191, %v1176, 0
        %v1199 = vsel %vm1191, %v1177, 0
        %v1202 = vsel %vm1191, %v1178, 0
        %v1205 = vsel %vm1191, %v1179, 0
        %v1208 = vsel %vm1191, %v1180, 0
        %v1211 = vsel %vm1191, %v1181, 0
        %v1214 = vsel %vm1191, %v1182, 0
        %v1217 = vsel %vm1191, %v1183, 0
        %v1220 = vsel %vm1191, %v1184, 0
        %v1223 = vsel %vm1191, %v1185, 0
        %v1226 = vsel %vm1191, %v1186, 0
        %v1229 = vsel %vm1191, %v1187, 0
        %v1232 = vsel %vm1191, %v1188, 0
        %v1235 = vsel %vm1191, %v1189, 0
        %v1238 = vsel %vm1191, %v1190, 0
        %vm1240 = vcmask 1040384
        %vm1241 = vcmask 1041408
        %v1242 = vsel %vm1240, 4294967295, 65535
        %v1243 = vsel %vm1241, %v1242, 0
        %v1245 = vand.u32 %v1142, %v1243
        %1247 = vmatpush.bf16.msra.mxu0 0
        %1248 = vmatpush.bf16.msra.mxu0 0
        %1249 = vmatpush.bf16.msra.mxu0 0
        %1250 = vmatpush.bf16.msra.mxu0 0
        %1251 = vmatpush.bf16.msra.mxu0 0
        %1252 = vmatpush.bf16.msra.mxu0 0
        %1253 = vmatpush.bf16.msra.mxu0 0
        %1254 = vmatpush.bf16.msra.mxu0 %v1245
        %1255 = vmatmul.bf16.gmra.mxu0 %v1193
        %v1256 = vpop.f32.mrf.mxu0
        %v1257 = vadd.f32 0.0, %v1256
        %v1258 = vpop.f32.mrf.mxu0
        %v1259 = vadd.f32 0.0, %v1258
        %1260 = vmatmul.bf16.gmra.mxu0 %v1196
        %v1261 = vpop.f32.mrf.mxu0
        %v1262 = vadd.f32 0.0, %v1261
        %v1263 = vpop.f32.mrf.mxu0
        %v1264 = vadd.f32 0.0, %v1263
        %1265 = vmatmul.bf16.gmra.mxu0 %v1199
        %v1266 = vpop.f32.mrf.mxu0
        %v1267 = vadd.f32 0.0, %v1266
        %v1268 = vpop.f32.mrf.mxu0
        %v1269 = vadd.f32 0.0, %v1268
        %1270 = vmatmul.bf16.gmra.mxu0 %v1202
        %v1271 = vpop.f32.mrf.mxu0
        %v1272 = vadd.f32 0.0, %v1271
        %v1273 = vpop.f32.mrf.mxu0
        %v1274 = vadd.f32 0.0, %v1273
        %1275 = vmatmul.bf16.gmra.mxu0 %v1205
        %v1276 = vpop.f32.mrf.mxu0
        %v1277 = vadd.f32 0.0, %v1276
        %v1278 = vpop.f32.mrf.mxu0
        %v1279 = vadd.f32 0.0, %v1278
        %1280 = vmatmul.bf16.gmra.mxu0 %v1208
        %v1281 = vpop.f32.mrf.mxu0
        %v1282 = vadd.f32 0.0, %v1281
        %v1283 = vpop.f32.mrf.mxu0
        %v1284 = vadd.f32 0.0, %v1283
        %1285 = vmatmul.bf16.gmra.mxu0 %v1211
        %v1286 = vpop.f32.mrf.mxu0
        %v1287 = vadd.f32 0.0, %v1286
        %v1288 = vpop.f32.mrf.mxu0
        %v1289 = vadd.f32 0.0, %v1288
        %1290 = vmatmul.bf16.gmra.mxu0 %v1214
        %v1291 = vpop.f32.mrf.mxu0
        %v1292 = vadd.f32 0.0, %v1291
        %v1293 = vpop.f32.mrf.mxu0
        %v1294 = vadd.f32 0.0, %v1293
        %1295 = vmatmul.bf16.gmra.mxu0 %v1217
        %v1296 = vpop.f32.mrf.mxu0
        %v1297 = vadd.f32 0.0, %v1296
        %v1298 = vpop.f32.mrf.mxu0
        %v1299 = vadd.f32 0.0, %v1298
        %1300 = vmatmul.bf16.gmra.mxu0 %v1220
        %v1301 = vpop.f32.mrf.mxu0
        %v1302 = vadd.f32 0.0, %v1301
        %v1303 = vpop.f32.mrf.mxu0
        %v1304 = vadd.f32 0.0, %v1303
        %1305 = vmatmul.bf16.gmra.mxu0 %v1223
        %v1306 = vpop.f32.mrf.mxu0
        %v1307 = vadd.f32 0.0, %v1306
        %v1308 = vpop.f32.mrf.mxu0
        %v1309 = vadd.f32 0.0, %v1308
        %1310 = vmatmul.bf16.gmra.mxu0 %v1226
        %v1311 = vpop.f32.mrf.mxu0
        %v1312 = vadd.f32 0.0, %v1311
        %v1313 = vpop.f32.mrf.mxu0
        %v1314 = vadd.f32 0.0, %v1313
        %1315 = vmatmul.bf16.gmra.mxu0 %v1229
        %v1316 = vpop.f32.mrf.mxu0
        %v1317 = vadd.f32 0.0, %v1316
        %v1318 = vpop.f32.mrf.mxu0
        %v1319 = vadd.f32 0.0, %v1318
        %1320 = vmatmul.bf16.gmra.mxu0 %v1232
        %v1321 = vpop.f32.mrf.mxu0
        %v1322 = vadd.f32 0.0, %v1321
        %v1323 = vpop.f32.mrf.mxu0
        %v1324 = vadd.f32 0.0, %v1323
        %1325 = vmatmul.bf16.gmra.mxu0 %v1235
        %v1326 = vpop.f32.mrf.mxu0
        %v1327 = vadd.f32 0.0, %v1326
        %v1328 = vpop.f32.mrf.mxu0
        %v1329 = vadd.f32 0.0, %v1328
        %1330 = vmatmul.bf16.gmra.mxu0 %v1238
        %v1331 = vpop.f32.mrf.mxu0
        %v1332 = vadd.f32 0.0, %v1331
        %v1333 = vpop.f32.mrf.mxu0
        %v1334 = vadd.f32 0.0, %v1333
        %1335 = vdwg.mxu0
        %v1368 = vunpack.c.l.b16 %v699
        %v1369 = vunpack.c.l.b16 %v700
        %v1370 = vunpack.c.l.b16 %v702
        %v1371 = vunpack.c.l.b16 %v703
        %v1372 = vunpack.c.l.b16 %v705
        %v1373 = vunpack.c.l.b16 %v706
        %v1374 = vunpack.c.l.b16 %v708
        %v1375 = vunpack.c.l.b16 %v709
        %v1376 = vunpack.c.l.b16 %v711
        %v1377 = vunpack.c.l.b16 %v712
        %v1378 = vunpack.c.l.b16 %v714
        %v1379 = vunpack.c.l.b16 %v715
        %v1380 = vunpack.c.l.b16 %v717
        %v1381 = vunpack.c.l.b16 %v718
        %v1382 = vunpack.c.l.b16 %v720
        %v1383 = vunpack.c.l.b16 %v721
        %v1384 = vunpack.c.l.b16 %v723
        %v1385 = vunpack.c.l.b16 %v724
        %v1386 = vunpack.c.l.b16 %v726
        %v1387 = vunpack.c.l.b16 %v727
        %v1388 = vunpack.c.l.b16 %v729
        %v1389 = vunpack.c.l.b16 %v730
        %v1390 = vunpack.c.l.b16 %v732
        %v1391 = vunpack.c.l.b16 %v733
        %v1392 = vunpack.c.l.b16 %v735
        %v1393 = vunpack.c.l.b16 %v736
        %v1394 = vunpack.c.l.b16 %v738
        %v1395 = vunpack.c.l.b16 %v739
        %v1396 = vunpack.c.l.b16 %v741
        %v1397 = vunpack.c.l.b16 %v742
        %v1398 = vunpack.c.l.b16 %v744
        %v1399 = vunpack.c.l.b16 %v745
        %v1400 = vpack.c.b16 %v1369, %v1368
        %v1401 = vpack.c.b16 %v1371, %v1370
        %v1402 = vpack.c.b16 %v1373, %v1372
        %v1403 = vpack.c.b16 %v1375, %v1374
        %v1404 = vpack.c.b16 %v1377, %v1376
        %v1405 = vpack.c.b16 %v1379, %v1378
        %v1406 = vpack.c.b16 %v1381, %v1380
        %v1407 = vpack.c.b16 %v1383, %v1382
        %v1408 = vpack.c.b16 %v1385, %v1384
        %v1409 = vpack.c.b16 %v1387, %v1386
        %v1410 = vpack.c.b16 %v1389, %v1388
        %v1411 = vpack.c.b16 %v1391, %v1390
        %v1412 = vpack.c.b16 %v1393, %v1392
        %v1413 = vpack.c.b16 %v1395, %v1394
        %v1414 = vpack.c.b16 %v1397, %v1396
        %v1415 = vpack.c.b16 %v1399, %v1398
        %v1417 = vsel %vm1191, %v1400, 0
        %v1420 = vsel %vm1191, %v1401, 0
        %v1423 = vsel %vm1191, %v1402, 0
        %v1426 = vsel %vm1191, %v1403, 0
        %v1429 = vsel %vm1191, %v1404, 0
        %v1432 = vsel %vm1191, %v1405, 0
        %v1435 = vsel %vm1191, %v1406, 0
        %v1438 = vsel %vm1191, %v1407, 0
        %v1441 = vsel %vm1191, %v1408, 0
        %v1444 = vsel %vm1191, %v1409, 0
        %v1447 = vsel %vm1191, %v1410, 0
        %v1450 = vsel %vm1191, %v1411, 0
        %v1453 = vsel %vm1191, %v1412, 0
        %v1456 = vsel %vm1191, %v1413, 0
        %v1459 = vsel %vm1191, %v1414, 0
        %v1462 = vsel %vm1191, %v1415, 0
        %v1465 = vand.u32 %v753, %v1243
        %1467 = vmatpush.bf16.msra.mxu0 0
        %1468 = vmatpush.bf16.msra.mxu0 0
        %1469 = vmatpush.bf16.msra.mxu0 0
        %1470 = vmatpush.bf16.msra.mxu0 0
        %1471 = vmatpush.bf16.msra.mxu0 0
        %1472 = vmatpush.bf16.msra.mxu0 0
        %1473 = vmatpush.bf16.msra.mxu0 0
        %1474 = vmatpush.bf16.msra.mxu0 %v1465
        %1475 = vmatmul.bf16.gmra.mxu0 %v1417
        %v1476 = vpop.f32.mrf.mxu0
        %v1477 = vadd.f32 %v1257, %v1476
        %v1478 = vpop.f32.mrf.mxu0
        %v1479 = vadd.f32 %v1259, %v1478
        %1480 = vmatmul.bf16.gmra.mxu0 %v1420
        %v1481 = vpop.f32.mrf.mxu0
        %v1482 = vadd.f32 %v1262, %v1481
        %v1483 = vpop.f32.mrf.mxu0
        %v1484 = vadd.f32 %v1264, %v1483
        %1485 = vmatmul.bf16.gmra.mxu0 %v1423
        %v1486 = vpop.f32.mrf.mxu0
        %v1487 = vadd.f32 %v1267, %v1486
        %v1488 = vpop.f32.mrf.mxu0
        %v1489 = vadd.f32 %v1269, %v1488
        %1490 = vmatmul.bf16.gmra.mxu0 %v1426
        %v1491 = vpop.f32.mrf.mxu0
        %v1492 = vadd.f32 %v1272, %v1491
        %v1493 = vpop.f32.mrf.mxu0
        %v1494 = vadd.f32 %v1274, %v1493
        %1495 = vmatmul.bf16.gmra.mxu0 %v1429
        %v1496 = vpop.f32.mrf.mxu0
        %v1497 = vadd.f32 %v1277, %v1496
        %v1498 = vpop.f32.mrf.mxu0
        %v1499 = vadd.f32 %v1279, %v1498
        %1500 = vmatmul.bf16.gmra.mxu0 %v1432
        %v1501 = vpop.f32.mrf.mxu0
        %v1502 = vadd.f32 %v1282, %v1501
        %v1503 = vpop.f32.mrf.mxu0
        %v1504 = vadd.f32 %v1284, %v1503
        %1505 = vmatmul.bf16.gmra.mxu0 %v1435
        %v1506 = vpop.f32.mrf.mxu0
        %v1507 = vadd.f32 %v1287, %v1506
        %v1508 = vpop.f32.mrf.mxu0
        %v1509 = vadd.f32 %v1289, %v1508
        %1510 = vmatmul.bf16.gmra.mxu0 %v1438
        %v1511 = vpop.f32.mrf.mxu0
        %v1512 = vadd.f32 %v1292, %v1511
        %v1513 = vpop.f32.mrf.mxu0
        %v1514 = vadd.f32 %v1294, %v1513
        %1515 = vmatmul.bf16.gmra.mxu0 %v1441
        %v1516 = vpop.f32.mrf.mxu0
        %v1517 = vadd.f32 %v1297, %v1516
        %v1518 = vpop.f32.mrf.mxu0
        %v1519 = vadd.f32 %v1299, %v1518
        %1520 = vmatmul.bf16.gmra.mxu0 %v1444
        %v1521 = vpop.f32.mrf.mxu0
        %v1522 = vadd.f32 %v1302, %v1521
        %v1523 = vpop.f32.mrf.mxu0
        %v1524 = vadd.f32 %v1304, %v1523
        %1525 = vmatmul.bf16.gmra.mxu0 %v1447
        %v1526 = vpop.f32.mrf.mxu0
        %v1527 = vadd.f32 %v1307, %v1526
        %v1528 = vpop.f32.mrf.mxu0
        %v1529 = vadd.f32 %v1309, %v1528
        %1530 = vmatmul.bf16.gmra.mxu0 %v1450
        %v1531 = vpop.f32.mrf.mxu0
        %v1532 = vadd.f32 %v1312, %v1531
        %v1533 = vpop.f32.mrf.mxu0
        %v1534 = vadd.f32 %v1314, %v1533
        %1535 = vmatmul.bf16.gmra.mxu0 %v1453
        %v1536 = vpop.f32.mrf.mxu0
        %v1537 = vadd.f32 %v1317, %v1536
        %v1538 = vpop.f32.mrf.mxu0
        %v1539 = vadd.f32 %v1319, %v1538
        %1540 = vmatmul.bf16.gmra.mxu0 %v1456
        %v1541 = vpop.f32.mrf.mxu0
        %v1542 = vadd.f32 %v1322, %v1541
        %v1543 = vpop.f32.mrf.mxu0
        %v1544 = vadd.f32 %v1324, %v1543
        %1545 = vmatmul.bf16.gmra.mxu0 %v1459
        %v1546 = vpop.f32.mrf.mxu0
        %v1547 = vadd.f32 %v1327, %v1546
        %v1548 = vpop.f32.mrf.mxu0
        %v1549 = vadd.f32 %v1329, %v1548
        %1550 = vmatmul.bf16.gmra.mxu0 %v1462
        %v1551 = vpop.f32.mrf.mxu0
        %v1552 = vadd.f32 %v1332, %v1551
        %v1553 = vpop.f32.mrf.mxu0
        %v1554 = vadd.f32 %v1334, %v1553
        %1555 = vdwg.mxu0
        %vm1572 = vcmask 1042432
        %vm1573 = vcmask 1046532
        %vm1574 = vmor %vm1572, %vm1573
        %v1575 = vrot.slane %v699, 5
        %v1576 = vrot.slane %v1575, 4
        %v1577 = vrot.slane %v700, 5
        %v1578 = vsel %vm1574, %v1576, %v1577
        %v1579 = vrot.slane %v1577, 4
        %v1580 = vrot.slane %v701, 5
        %v1581 = vsel %vm1574, %v1579, %v1580
        %v1582 = vrot.slane %v702, 5
        %v1583 = vrot.slane %v1582, 4
        %v1584 = vrot.slane %v703, 5
        %v1585 = vsel %vm1574, %v1583, %v1584
        %v1586 = vrot.slane %v1584, 4
        %v1587 = vrot.slane %v704, 5
        %v1588 = vsel %vm1574, %v1586, %v1587
        %v1589 = vrot.slane %v705, 5
        %v1590 = vrot.slane %v1589, 4
        %v1591 = vrot.slane %v706, 5
        %v1592 = vsel %vm1574, %v1590, %v1591
        %v1593 = vrot.slane %v1591, 4
        %v1594 = vrot.slane %v707, 5
        %v1595 = vsel %vm1574, %v1593, %v1594
        %v1596 = vrot.slane %v708, 5
        %v1597 = vrot.slane %v1596, 4
        %v1598 = vrot.slane %v709, 5
        %v1599 = vsel %vm1574, %v1597, %v1598
        %v1600 = vrot.slane %v1598, 4
        %v1601 = vrot.slane %v710, 5
        %v1602 = vsel %vm1574, %v1600, %v1601
        %v1603 = vrot.slane %v711, 5
        %v1604 = vrot.slane %v1603, 4
        %v1605 = vrot.slane %v712, 5
        %v1606 = vsel %vm1574, %v1604, %v1605
        %v1607 = vrot.slane %v1605, 4
        %v1608 = vrot.slane %v713, 5
        %v1609 = vsel %vm1574, %v1607, %v1608
        %v1610 = vrot.slane %v714, 5
        %v1611 = vrot.slane %v1610, 4
        %v1612 = vrot.slane %v715, 5
        %v1613 = vsel %vm1574, %v1611, %v1612
        %v1614 = vrot.slane %v1612, 4
        %v1615 = vrot.slane %v716, 5
        %v1616 = vsel %vm1574, %v1614, %v1615
        %v1617 = vrot.slane %v717, 5
        %v1618 = vrot.slane %v1617, 4
        %v1619 = vrot.slane %v718, 5
        %v1620 = vsel %vm1574, %v1618, %v1619
        %v1621 = vrot.slane %v1619, 4
        %v1622 = vrot.slane %v719, 5
        %v1623 = vsel %vm1574, %v1621, %v1622
        %v1624 = vrot.slane %v720, 5
        %v1625 = vrot.slane %v1624, 4
        %v1626 = vrot.slane %v721, 5
        %v1627 = vsel %vm1574, %v1625, %v1626
        %v1628 = vrot.slane %v1626, 4
        %v1629 = vrot.slane %v722, 5
        %v1630 = vsel %vm1574, %v1628, %v1629
        %v1631 = vrot.slane %v723, 5
        %v1632 = vrot.slane %v1631, 4
        %v1633 = vrot.slane %v724, 5
        %v1634 = vsel %vm1574, %v1632, %v1633
        %v1635 = vrot.slane %v1633, 4
        %v1636 = vrot.slane %v725, 5
        %v1637 = vsel %vm1574, %v1635, %v1636
        %v1638 = vrot.slane %v726, 5
        %v1639 = vrot.slane %v1638, 4
        %v1640 = vrot.slane %v727, 5
        %v1641 = vsel %vm1574, %v1639, %v1640
        %v1642 = vrot.slane %v1640, 4
        %v1643 = vrot.slane %v728, 5
        %v1644 = vsel %vm1574, %v1642, %v1643
        %v1645 = vrot.slane %v729, 5
        %v1646 = vrot.slane %v1645, 4
        %v1647 = vrot.slane %v730, 5
        %v1648 = vsel %vm1574, %v1646, %v1647
        %v1649 = vrot.slane %v1647, 4
        %v1650 = vrot.slane %v731, 5
        %v1651 = vsel %vm1574, %v1649, %v1650
        %v1652 = vrot.slane %v732, 5
        %v1653 = vrot.slane %v1652, 4
        %v1654 = vrot.slane %v733, 5
        %v1655 = vsel %vm1574, %v1653, %v1654
        %v1656 = vrot.slane %v1654, 4
        %v1657 = vrot.slane %v734, 5
        %v1658 = vsel %vm1574, %v1656, %v1657
        %v1659 = vrot.slane %v735, 5
        %v1660 = vrot.slane %v1659, 4
        %v1661 = vrot.slane %v736, 5
        %v1662 = vsel %vm1574, %v1660, %v1661
        %v1663 = vrot.slane %v1661, 4
        %v1664 = vrot.slane %v737, 5
        %v1665 = vsel %vm1574, %v1663, %v1664
        %v1666 = vrot.slane %v738, 5
        %v1667 = vrot.slane %v1666, 4
        %v1668 = vrot.slane %v739, 5
        %v1669 = vsel %vm1574, %v1667, %v1668
        %v1670 = vrot.slane %v1668, 4
        %v1671 = vrot.slane %v740, 5
        %v1672 = vsel %vm1574, %v1670, %v1671
        %v1673 = vrot.slane %v741, 5
        %v1674 = vrot.slane %v1673, 4
        %v1675 = vrot.slane %v742, 5
        %v1676 = vsel %vm1574, %v1674, %v1675
        %v1677 = vrot.slane %v1675, 4
        %v1678 = vrot.slane %v743, 5
        %v1679 = vsel %vm1574, %v1677, %v1678
        %v1680 = vrot.slane %v744, 5
        %v1681 = vrot.slane %v1680, 4
        %v1682 = vrot.slane %v745, 5
        %v1683 = vsel %vm1574, %v1681, %v1682
        %v1684 = vrot.slane %v1682, 4
        %v1685 = vrot.slane %v746, 5
        %v1686 = vsel %vm1574, %v1684, %v1685
        %s1687 = scalar_lea.vmem %s1, 4
        %v1688 = vld [vmem:[%s1687] sm:$0x3]
        %v1689 = vunpack.c.l.b16 %v1578
        %v1690 = vunpack.c.l.b16 %v1581
        %v1691 = vunpack.c.l.b16 %v1585
        %v1692 = vunpack.c.l.b16 %v1588
        %v1693 = vunpack.c.l.b16 %v1592
        %v1694 = vunpack.c.l.b16 %v1595
        %v1695 = vunpack.c.l.b16 %v1599
        %v1696 = vunpack.c.l.b16 %v1602
        %v1697 = vunpack.c.l.b16 %v1606
        %v1698 = vunpack.c.l.b16 %v1609
        %v1699 = vunpack.c.l.b16 %v1613
        %v1700 = vunpack.c.l.b16 %v1616
        %v1701 = vunpack.c.l.b16 %v1620
        %v1702 = vunpack.c.l.b16 %v1623
        %v1703 = vunpack.c.l.b16 %v1627
        %v1704 = vunpack.c.l.b16 %v1630
        %v1705 = vunpack.c.l.b16 %v1634
        %v1706 = vunpack.c.l.b16 %v1637
        %v1707 = vunpack.c.l.b16 %v1641
        %v1708 = vunpack.c.l.b16 %v1644
        %v1709 = vunpack.c.l.b16 %v1648
        %v1710 = vunpack.c.l.b16 %v1651
        %v1711 = vunpack.c.l.b16 %v1655
        %v1712 = vunpack.c.l.b16 %v1658
        %v1713 = vunpack.c.l.b16 %v1662
        %v1714 = vunpack.c.l.b16 %v1665
        %v1715 = vunpack.c.l.b16 %v1669
        %v1716 = vunpack.c.l.b16 %v1672
        %v1717 = vunpack.c.l.b16 %v1676
        %v1718 = vunpack.c.l.b16 %v1679
        %v1719 = vunpack.c.l.b16 %v1683
        %v1720 = vunpack.c.l.b16 %v1686
        %v1721 = vpack.c.b16 %v1690, %v1689
        %v1722 = vpack.c.b16 %v1692, %v1691
        %v1723 = vpack.c.b16 %v1694, %v1693
        %v1724 = vpack.c.b16 %v1696, %v1695
        %v1725 = vpack.c.b16 %v1698, %v1697
        %v1726 = vpack.c.b16 %v1700, %v1699
        %v1727 = vpack.c.b16 %v1702, %v1701
        %v1728 = vpack.c.b16 %v1704, %v1703
        %v1729 = vpack.c.b16 %v1706, %v1705
        %v1730 = vpack.c.b16 %v1708, %v1707
        %v1731 = vpack.c.b16 %v1710, %v1709
        %v1732 = vpack.c.b16 %v1712, %v1711
        %v1733 = vpack.c.b16 %v1714, %v1713
        %v1734 = vpack.c.b16 %v1716, %v1715
        %v1735 = vpack.c.b16 %v1718, %v1717
        %v1736 = vpack.c.b16 %v1720, %v1719
        %v1738 = vsel %vm1191, %v1721, 0
        %v1741 = vsel %vm1191, %v1722, 0
        %v1744 = vsel %vm1191, %v1723, 0
        %v1747 = vsel %vm1191, %v1724, 0
        %v1750 = vsel %vm1191, %v1725, 0
        %v1753 = vsel %vm1191, %v1726, 0
        %v1756 = vsel %vm1191, %v1727, 0
        %v1759 = vsel %vm1191, %v1728, 0
        %v1762 = vsel %vm1191, %v1729, 0
        %v1765 = vsel %vm1191, %v1730, 0
        %v1768 = vsel %vm1191, %v1731, 0
        %v1771 = vsel %vm1191, %v1732, 0
        %v1774 = vsel %vm1191, %v1733, 0
        %v1777 = vsel %vm1191, %v1734, 0
        %v1780 = vsel %vm1191, %v1735, 0
        %v1783 = vsel %vm1191, %v1736, 0
        %v1786 = vand.u32 %v1688, %v1243
        %1788 = vmatpush.bf16.msra.mxu0 0
        %1789 = vmatpush.bf16.msra.mxu0 0
        %1790 = vmatpush.bf16.msra.mxu0 0
        %1791 = vmatpush.bf16.msra.mxu0 0
        %1792 = vmatpush.bf16.msra.mxu0 0
        %1793 = vmatpush.bf16.msra.mxu0 0
        %1794 = vmatpush.bf16.msra.mxu0 0
        %1795 = vmatpush.bf16.msra.mxu0 %v1786
        %1796 = vmatmul.bf16.gmra.mxu0 %v1738
        %v1797 = vpop.f32.mrf.mxu0
        %v1798 = vadd.f32 0.0, %v1797
        %v1799 = vpop.f32.mrf.mxu0
        %v1800 = vadd.f32 0.0, %v1799
        %1801 = vmatmul.bf16.gmra.mxu0 %v1741
        %v1802 = vpop.f32.mrf.mxu0
        %v1803 = vadd.f32 0.0, %v1802
        %v1804 = vpop.f32.mrf.mxu0
        %v1805 = vadd.f32 0.0, %v1804
        %1806 = vmatmul.bf16.gmra.mxu0 %v1744
        %v1807 = vpop.f32.mrf.mxu0
        %v1808 = vadd.f32 0.0, %v1807
        %v1809 = vpop.f32.mrf.mxu0
        %v1810 = vadd.f32 0.0, %v1809
        %1811 = vmatmul.bf16.gmra.mxu0 %v1747
        %v1812 = vpop.f32.mrf.mxu0
        %v1813 = vadd.f32 0.0, %v1812
        %v1814 = vpop.f32.mrf.mxu0
        %v1815 = vadd.f32 0.0, %v1814
        %1816 = vmatmul.bf16.gmra.mxu0 %v1750
        %v1817 = vpop.f32.mrf.mxu0
        %v1818 = vadd.f32 0.0, %v1817
        %v1819 = vpop.f32.mrf.mxu0
        %v1820 = vadd.f32 0.0, %v1819
        %1821 = vmatmul.bf16.gmra.mxu0 %v1753
        %v1822 = vpop.f32.mrf.mxu0
        %v1823 = vadd.f32 0.0, %v1822
        %v1824 = vpop.f32.mrf.mxu0
        %v1825 = vadd.f32 0.0, %v1824
        %1826 = vmatmul.bf16.gmra.mxu0 %v1756
        %v1827 = vpop.f32.mrf.mxu0
        %v1828 = vadd.f32 0.0, %v1827
        %v1829 = vpop.f32.mrf.mxu0
        %v1830 = vadd.f32 0.0, %v1829
        %1831 = vmatmul.bf16.gmra.mxu0 %v1759
        %v1832 = vpop.f32.mrf.mxu0
        %v1833 = vadd.f32 0.0, %v1832
        %v1834 = vpop.f32.mrf.mxu0
        %v1835 = vadd.f32 0.0, %v1834
        %1836 = vmatmul.bf16.gmra.mxu0 %v1762
        %v1837 = vpop.f32.mrf.mxu0
        %v1838 = vadd.f32 0.0, %v1837
        %v1839 = vpop.f32.mrf.mxu0
        %v1840 = vadd.f32 0.0, %v1839
        %1841 = vmatmul.bf16.gmra.mxu0 %v1765
        %v1842 = vpop.f32.mrf.mxu0
        %v1843 = vadd.f32 0.0, %v1842
        %v1844 = vpop.f32.mrf.mxu0
        %v1845 = vadd.f32 0.0, %v1844
        %1846 = vmatmul.bf16.gmra.mxu0 %v1768
        %v1847 = vpop.f32.mrf.mxu0
        %v1848 = vadd.f32 0.0, %v1847
        %v1849 = vpop.f32.mrf.mxu0
        %v1850 = vadd.f32 0.0, %v1849
        %1851 = vmatmul.bf16.gmra.mxu0 %v1771
        %v1852 = vpop.f32.mrf.mxu0
        %v1853 = vadd.f32 0.0, %v1852
        %v1854 = vpop.f32.mrf.mxu0
        %v1855 = vadd.f32 0.0, %v1854
        %1856 = vmatmul.bf16.gmra.mxu0 %v1774
        %v1857 = vpop.f32.mrf.mxu0
        %v1858 = vadd.f32 0.0, %v1857
        %v1859 = vpop.f32.mrf.mxu0
        %v1860 = vadd.f32 0.0, %v1859
        %1861 = vmatmul.bf16.gmra.mxu0 %v1777
        %v1862 = vpop.f32.mrf.mxu0
        %v1863 = vadd.f32 0.0, %v1862
        %v1864 = vpop.f32.mrf.mxu0
        %v1865 = vadd.f32 0.0, %v1864
        %1866 = vmatmul.bf16.gmra.mxu0 %v1780
        %v1867 = vpop.f32.mrf.mxu0
        %v1868 = vadd.f32 0.0, %v1867
        %v1869 = vpop.f32.mrf.mxu0
        %v1870 = vadd.f32 0.0, %v1869
        %1871 = vmatmul.bf16.gmra.mxu0 %v1783
        %v1872 = vpop.f32.mrf.mxu0
        %v1873 = vadd.f32 0.0, %v1872
        %v1874 = vpop.f32.mrf.mxu0
        %v1875 = vadd.f32 0.0, %v1874
        %1876 = vdwg.mxu0
        %v1877 = vadd.f32 %v1477, %v1798
        %v1878 = vadd.f32 %v1479, %v1800
        %v1879 = vadd.f32 %v1482, %v1803
        %v1880 = vadd.f32 %v1484, %v1805
        %v1881 = vadd.f32 %v1487, %v1808
        %v1882 = vadd.f32 %v1489, %v1810
        %v1883 = vadd.f32 %v1492, %v1813
        %v1884 = vadd.f32 %v1494, %v1815
        %v1885 = vadd.f32 %v1497, %v1818
        %v1886 = vadd.f32 %v1499, %v1820
        %v1887 = vadd.f32 %v1502, %v1823
        %v1888 = vadd.f32 %v1504, %v1825
        %v1889 = vadd.f32 %v1507, %v1828
        %v1890 = vadd.f32 %v1509, %v1830
        %v1891 = vadd.f32 %v1512, %v1833
        %v1892 = vadd.f32 %v1514, %v1835
        %v1893 = vadd.f32 %v1517, %v1838
        %v1894 = vadd.f32 %v1519, %v1840
        %v1895 = vadd.f32 %v1522, %v1843
        %v1896 = vadd.f32 %v1524, %v1845
        %v1897 = vadd.f32 %v1527, %v1848
        %v1898 = vadd.f32 %v1529, %v1850
        %v1899 = vadd.f32 %v1532, %v1853
        %v1900 = vadd.f32 %v1534, %v1855
        %v1901 = vadd.f32 %v1537, %v1858
        %v1902 = vadd.f32 %v1539, %v1860
        %v1903 = vadd.f32 %v1542, %v1863
        %v1904 = vadd.f32 %v1544, %v1865
        %v1905 = vadd.f32 %v1547, %v1868
        %v1906 = vadd.f32 %v1549, %v1870
        %v1907 = vadd.f32 %v1552, %v1873
        %v1908 = vadd.f32 %v1554, %v1875
        %s1909 = scalar_lea.vmem %s1, 6
        %v1910 = vld [vmem:[%s1909] sm:$0x3]
        %v1913 = vunpack.c.l.b16 %v747
        %v1914 = vunpack.c.l.b16 %v748
        %v1915 = vpack.c.b16 %v1914, %v1913
        %v1917 = vsel %vm1191, %v1915, 0
        %v1920 = vand.u32 %v1910, %v1243
        %1922 = vmatpush.bf16.msra.mxu0 0
        %1923 = vmatpush.bf16.msra.mxu0 0
        %1924 = vmatpush.bf16.msra.mxu0 0
        %1925 = vmatpush.bf16.msra.mxu0 0
        %1926 = vmatpush.bf16.msra.mxu0 0
        %1927 = vmatpush.bf16.msra.mxu0 0
        %1928 = vmatpush.bf16.msra.mxu0 0
        %1929 = vmatpush.bf16.msra.mxu0 %v1920
        %1930 = vmatmul.bf16.gmra.mxu0 %v1420
        %v1931 = vpop.f32.mrf.mxu0
        %v1932 = vadd.f32 0.0, %v1931
        %v1933 = vpop.f32.mrf.mxu0
        %v1934 = vadd.f32 0.0, %v1933
        %1935 = vmatmul.bf16.gmra.mxu0 %v1423
        %v1936 = vpop.f32.mrf.mxu0
        %v1937 = vadd.f32 0.0, %v1936
        %v1938 = vpop.f32.mrf.mxu0
        %v1939 = vadd.f32 0.0, %v1938
        %1940 = vmatmul.bf16.gmra.mxu0 %v1426
        %v1941 = vpop.f32.mrf.mxu0
        %v1942 = vadd.f32 0.0, %v1941
        %v1943 = vpop.f32.mrf.mxu0
        %v1944 = vadd.f32 0.0, %v1943
        %1945 = vmatmul.bf16.gmra.mxu0 %v1429
        %v1946 = vpop.f32.mrf.mxu0
        %v1947 = vadd.f32 0.0, %v1946
        %v1948 = vpop.f32.mrf.mxu0
        %v1949 = vadd.f32 0.0, %v1948
        %1950 = vmatmul.bf16.gmra.mxu0 %v1432
        %v1951 = vpop.f32.mrf.mxu0
        %v1952 = vadd.f32 0.0, %v1951
        %v1953 = vpop.f32.mrf.mxu0
        %v1954 = vadd.f32 0.0, %v1953
        %1955 = vmatmul.bf16.gmra.mxu0 %v1435
        %v1956 = vpop.f32.mrf.mxu0
        %v1957 = vadd.f32 0.0, %v1956
        %v1958 = vpop.f32.mrf.mxu0
        %v1959 = vadd.f32 0.0, %v1958
        %1960 = vmatmul.bf16.gmra.mxu0 %v1438
        %v1961 = vpop.f32.mrf.mxu0
        %v1962 = vadd.f32 0.0, %v1961
        %v1963 = vpop.f32.mrf.mxu0
        %v1964 = vadd.f32 0.0, %v1963
        %1965 = vmatmul.bf16.gmra.mxu0 %v1441
        %v1966 = vpop.f32.mrf.mxu0
        %v1967 = vadd.f32 0.0, %v1966
        %v1968 = vpop.f32.mrf.mxu0
        %v1969 = vadd.f32 0.0, %v1968
        %1970 = vmatmul.bf16.gmra.mxu0 %v1444
        %v1971 = vpop.f32.mrf.mxu0
        %v1972 = vadd.f32 0.0, %v1971
        %v1973 = vpop.f32.mrf.mxu0
        %v1974 = vadd.f32 0.0, %v1973
        %1975 = vmatmul.bf16.gmra.mxu0 %v1447
        %v1976 = vpop.f32.mrf.mxu0
        %v1977 = vadd.f32 0.0, %v1976
        %v1978 = vpop.f32.mrf.mxu0
        %v1979 = vadd.f32 0.0, %v1978
        %1980 = vmatmul.bf16.gmra.mxu0 %v1450
        %v1981 = vpop.f32.mrf.mxu0
        %v1982 = vadd.f32 0.0, %v1981
        %v1983 = vpop.f32.mrf.mxu0
        %v1984 = vadd.f32 0.0, %v1983
        %1985 = vmatmul.bf16.gmra.mxu0 %v1453
        %v1986 = vpop.f32.mrf.mxu0
        %v1987 = vadd.f32 0.0, %v1986
        %v1988 = vpop.f32.mrf.mxu0
        %v1989 = vadd.f32 0.0, %v1988
        %1990 = vmatmul.bf16.gmra.mxu0 %v1456
        %v1991 = vpop.f32.mrf.mxu0
        %v1992 = vadd.f32 0.0, %v1991
        %v1993 = vpop.f32.mrf.mxu0
        %v1994 = vadd.f32 0.0, %v1993
        %1995 = vmatmul.bf16.gmra.mxu0 %v1459
        %v1996 = vpop.f32.mrf.mxu0
        %v1997 = vadd.f32 0.0, %v1996
        %v1998 = vpop.f32.mrf.mxu0
        %v1999 = vadd.f32 0.0, %v1998
        %2000 = vmatmul.bf16.gmra.mxu0 %v1462
        %v2001 = vpop.f32.mrf.mxu0
        %v2002 = vadd.f32 0.0, %v2001
        %v2003 = vpop.f32.mrf.mxu0
        %v2004 = vadd.f32 0.0, %v2003
        %2005 = vmatmul.bf16.gmra.mxu0 %v1917
        %v2006 = vpop.f32.mrf.mxu0
        %v2007 = vadd.f32 0.0, %v2006
        %v2008 = vpop.f32.mrf.mxu0
        %v2009 = vadd.f32 0.0, %v2008
        %2010 = vdwg.mxu0
        %v2011 = vadd.f32 %v1877, %v1932
        %v2012 = vadd.f32 %v1878, %v1934
        %v2013 = vadd.f32 %v1879, %v1937
        %v2014 = vadd.f32 %v1880, %v1939
        %v2015 = vadd.f32 %v1881, %v1942
        %v2016 = vadd.f32 %v1882, %v1944
        %v2017 = vadd.f32 %v1883, %v1947
        %v2018 = vadd.f32 %v1884, %v1949
        %v2019 = vadd.f32 %v1885, %v1952
        %v2020 = vadd.f32 %v1886, %v1954
        %v2021 = vadd.f32 %v1887, %v1957
        %v2022 = vadd.f32 %v1888, %v1959
        %v2023 = vadd.f32 %v1889, %v1962
        %v2024 = vadd.f32 %v1890, %v1964
        %v2025 = vadd.f32 %v1891, %v1967
        %v2026 = vadd.f32 %v1892, %v1969
        %v2027 = vadd.f32 %v1893, %v1972
        %v2028 = vadd.f32 %v1894, %v1974
        %v2029 = vadd.f32 %v1895, %v1977
        %v2030 = vadd.f32 %v1896, %v1979
        %v2031 = vadd.f32 %v1897, %v1982
        %v2032 = vadd.f32 %v1898, %v1984
        %v2033 = vadd.f32 %v1899, %v1987
        %v2034 = vadd.f32 %v1900, %v1989
        %v2035 = vadd.f32 %v1901, %v1992
        %v2036 = vadd.f32 %v1902, %v1994
        %v2037 = vadd.f32 %v1903, %v1997
        %v2038 = vadd.f32 %v1904, %v1999
        %v2039 = vadd.f32 %v1905, %v2002
        %v2040 = vadd.f32 %v1906, %v2004
        %v2041 = vadd.f32 %v1907, %v2007
        %v2042 = vadd.f32 %v1908, %v2009
        %v2044 = vshrl.u32 %v747, 16
        %v2046 = vrot.slane %v2044, 4
        %v2047 = vshll.u32 %v747, 16
        %v2049 = vrot.slane %v2047, 5
        %v2050 = vor.u32 %v2046, %v2049
        %v2051 = vrot.slane %v2050, 4
        %v2053 = vshll.u32 %v748, 16
        %v2055 = vrot.slane %v2053, 5
        %v2056 = vsel %vm756, %v2051, %v2055
        %v2057 = vshrl.u32 %v748, 16
        %v2059 = vrot.slane %v2057, 4
        %v2060 = vor.u32 %v2059, %v2055
        %v2061 = vrot.slane %v2060, 4
        %v2063 = vshll.u32 %v749, 16
        %v2065 = vrot.slane %v2063, 5
        %v2066 = vsel %vm756, %v2061, %v2065
        %s2067 = scalar_lea.vmem %s1, 8
        %v2068 = vld [vmem:[%s2067] sm:$0x3]
        %v2069 = vunpack.c.l.b16 %v2056
        %v2070 = vunpack.c.l.b16 %v2066
        %v2071 = vpack.c.b16 %v2070, %v2069
        %v2073 = vsel %vm1191, %v2071, 0
        %v2076 = vand.u32 %v2068, %v1243
        %2078 = vmatpush.bf16.msra.mxu0 0
        %2079 = vmatpush.bf16.msra.mxu0 0
        %2080 = vmatpush.bf16.msra.mxu0 0
        %2081 = vmatpush.bf16.msra.mxu0 0
        %2082 = vmatpush.bf16.msra.mxu0 0
        %2083 = vmatpush.bf16.msra.mxu0 0
        %2084 = vmatpush.bf16.msra.mxu0 0
        %2085 = vmatpush.bf16.msra.mxu0 %v2076
        %2086 = vmatmul.bf16.gmra.mxu0 %v1196
        %v2087 = vpop.f32.mrf.mxu0
        %v2088 = vadd.f32 0.0, %v2087
        %v2089 = vpop.f32.mrf.mxu0
        %v2090 = vadd.f32 0.0, %v2089
        %2091 = vmatmul.bf16.gmra.mxu0 %v1199
        %v2092 = vpop.f32.mrf.mxu0
        %v2093 = vadd.f32 0.0, %v2092
        %v2094 = vpop.f32.mrf.mxu0
        %v2095 = vadd.f32 0.0, %v2094
        %2096 = vmatmul.bf16.gmra.mxu0 %v1202
        %v2097 = vpop.f32.mrf.mxu0
        %v2098 = vadd.f32 0.0, %v2097
        %v2099 = vpop.f32.mrf.mxu0
        %v2100 = vadd.f32 0.0, %v2099
        %2101 = vmatmul.bf16.gmra.mxu0 %v1205
        %v2102 = vpop.f32.mrf.mxu0
        %v2103 = vadd.f32 0.0, %v2102
        %v2104 = vpop.f32.mrf.mxu0
        %v2105 = vadd.f32 0.0, %v2104
        %2106 = vmatmul.bf16.gmra.mxu0 %v1208
        %v2107 = vpop.f32.mrf.mxu0
        %v2108 = vadd.f32 0.0, %v2107
        %v2109 = vpop.f32.mrf.mxu0
        %v2110 = vadd.f32 0.0, %v2109
        %2111 = vmatmul.bf16.gmra.mxu0 %v1211
        %v2112 = vpop.f32.mrf.mxu0
        %v2113 = vadd.f32 0.0, %v2112
        %v2114 = vpop.f32.mrf.mxu0
        %v2115 = vadd.f32 0.0, %v2114
        %2116 = vmatmul.bf16.gmra.mxu0 %v1214
        %v2117 = vpop.f32.mrf.mxu0
        %v2118 = vadd.f32 0.0, %v2117
        %v2119 = vpop.f32.mrf.mxu0
        %v2120 = vadd.f32 0.0, %v2119
        %2121 = vmatmul.bf16.gmra.mxu0 %v1217
        %v2122 = vpop.f32.mrf.mxu0
        %v2123 = vadd.f32 0.0, %v2122
        %v2124 = vpop.f32.mrf.mxu0
        %v2125 = vadd.f32 0.0, %v2124
        %2126 = vmatmul.bf16.gmra.mxu0 %v1220
        %v2127 = vpop.f32.mrf.mxu0
        %v2128 = vadd.f32 0.0, %v2127
        %v2129 = vpop.f32.mrf.mxu0
        %v2130 = vadd.f32 0.0, %v2129
        %2131 = vmatmul.bf16.gmra.mxu0 %v1223
        %v2132 = vpop.f32.mrf.mxu0
        %v2133 = vadd.f32 0.0, %v2132
        %v2134 = vpop.f32.mrf.mxu0
        %v2135 = vadd.f32 0.0, %v2134
        %2136 = vmatmul.bf16.gmra.mxu0 %v1226
        %v2137 = vpop.f32.mrf.mxu0
        %v2138 = vadd.f32 0.0, %v2137
        %v2139 = vpop.f32.mrf.mxu0
        %v2140 = vadd.f32 0.0, %v2139
        %2141 = vmatmul.bf16.gmra.mxu0 %v1229
        %v2142 = vpop.f32.mrf.mxu0
        %v2143 = vadd.f32 0.0, %v2142
        %v2144 = vpop.f32.mrf.mxu0
        %v2145 = vadd.f32 0.0, %v2144
        %2146 = vmatmul.bf16.gmra.mxu0 %v1232
        %v2147 = vpop.f32.mrf.mxu0
        %v2148 = vadd.f32 0.0, %v2147
        %v2149 = vpop.f32.mrf.mxu0
        %v2150 = vadd.f32 0.0, %v2149
        %2151 = vmatmul.bf16.gmra.mxu0 %v1235
        %v2152 = vpop.f32.mrf.mxu0
        %v2153 = vadd.f32 0.0, %v2152
        %v2154 = vpop.f32.mrf.mxu0
        %v2155 = vadd.f32 0.0, %v2154
        %2156 = vmatmul.bf16.gmra.mxu0 %v1238
        %v2157 = vpop.f32.mrf.mxu0
        %v2158 = vadd.f32 0.0, %v2157
        %v2159 = vpop.f32.mrf.mxu0
        %v2160 = vadd.f32 0.0, %v2159
        %2161 = vmatmul.bf16.gmra.mxu0 %v2073
        %v2162 = vpop.f32.mrf.mxu0
        %v2163 = vadd.f32 0.0, %v2162
        %v2164 = vpop.f32.mrf.mxu0
        %v2165 = vadd.f32 0.0, %v2164
        %2166 = vdwg.mxu0
        %v2167 = vadd.f32 %v2011, %v2088
        %v2168 = vadd.f32 %v2012, %v2090
        %v2169 = vadd.f32 %v2013, %v2093
        %v2170 = vadd.f32 %v2014, %v2095
        %v2171 = vadd.f32 %v2015, %v2098
        %v2172 = vadd.f32 %v2016, %v2100
        %v2173 = vadd.f32 %v2017, %v2103
        %v2174 = vadd.f32 %v2018, %v2105
        %v2175 = vadd.f32 %v2019, %v2108
        %v2176 = vadd.f32 %v2020, %v2110
        %v2177 = vadd.f32 %v2021, %v2113
        %v2178 = vadd.f32 %v2022, %v2115
        %v2179 = vadd.f32 %v2023, %v2118
        %v2180 = vadd.f32 %v2024, %v2120
        %v2181 = vadd.f32 %v2025, %v2123
        %v2182 = vadd.f32 %v2026, %v2125
        %v2183 = vadd.f32 %v2027, %v2128
        %v2184 = vadd.f32 %v2028, %v2130
        %v2185 = vadd.f32 %v2029, %v2133
        %v2186 = vadd.f32 %v2030, %v2135
        %v2187 = vadd.f32 %v2031, %v2138
        %v2188 = vadd.f32 %v2032, %v2140
        %v2189 = vadd.f32 %v2033, %v2143
        %v2190 = vadd.f32 %v2034, %v2145
        %v2191 = vadd.f32 %v2035, %v2148
        %v2192 = vadd.f32 %v2036, %v2150
        %v2193 = vadd.f32 %v2037, %v2153
        %v2194 = vadd.f32 %v2038, %v2155
        %v2195 = vadd.f32 %v2039, %v2158
        %v2196 = vadd.f32 %v2040, %v2160
        %v2197 = vadd.f32 %v2041, %v2163
        %v2198 = vadd.f32 %v2042, %v2165
        %v2200 = vrot.slane %v747, 5
        %v2201 = vrot.slane %v2200, 4
        %v2202 = vrot.slane %v748, 5
        %v2203 = vsel %vm1574, %v2201, %v2202
        %v2204 = vrot.slane %v2202, 4
        %v2205 = vrot.slane %v749, 5
        %v2206 = vsel %vm1574, %v2204, %v2205
        %s2207 = scalar_lea.vmem %s1, 10
        %v2208 = vld [vmem:[%s2207] sm:$0x3]
        %v2209 = vunpack.c.l.b16 %v2203
        %v2210 = vunpack.c.l.b16 %v2206
        %v2211 = vpack.c.b16 %v2210, %v2209
        %v2213 = vsel %vm1191, %v2211, 0
        %v2216 = vand.u32 %v2208, %v1243
        %2218 = vmatpush.bf16.msra.mxu0 0
        %2219 = vmatpush.bf16.msra.mxu0 0
        %2220 = vmatpush.bf16.msra.mxu0 0
        %2221 = vmatpush.bf16.msra.mxu0 0
        %2222 = vmatpush.bf16.msra.mxu0 0
        %2223 = vmatpush.bf16.msra.mxu0 0
        %2224 = vmatpush.bf16.msra.mxu0 0
        %2225 = vmatpush.bf16.msra.mxu0 %v2216
        %2226 = vmatmul.bf16.gmra.mxu0 %v1741
        %v2227 = vpop.f32.mrf.mxu0
        %v2228 = vadd.f32 0.0, %v2227
        %v2229 = vpop.f32.mrf.mxu0
        %v2230 = vadd.f32 0.0, %v2229
        %2231 = vmatmul.bf16.gmra.mxu0 %v1744
        %v2232 = vpop.f32.mrf.mxu0
        %v2233 = vadd.f32 0.0, %v2232
        %v2234 = vpop.f32.mrf.mxu0
        %v2235 = vadd.f32 0.0, %v2234
        %2236 = vmatmul.bf16.gmra.mxu0 %v1747
        %v2237 = vpop.f32.mrf.mxu0
        %v2238 = vadd.f32 0.0, %v2237
        %v2239 = vpop.f32.mrf.mxu0
        %v2240 = vadd.f32 0.0, %v2239
        %2241 = vmatmul.bf16.gmra.mxu0 %v1750
        %v2242 = vpop.f32.mrf.mxu0
        %v2243 = vadd.f32 0.0, %v2242
        %v2244 = vpop.f32.mrf.mxu0
        %v2245 = vadd.f32 0.0, %v2244
        %2246 = vmatmul.bf16.gmra.mxu0 %v1753
        %v2247 = vpop.f32.mrf.mxu0
        %v2248 = vadd.f32 0.0, %v2247
        %v2249 = vpop.f32.mrf.mxu0
        %v2250 = vadd.f32 0.0, %v2249
        %2251 = vmatmul.bf16.gmra.mxu0 %v1756
        %v2252 = vpop.f32.mrf.mxu0
        %v2253 = vadd.f32 0.0, %v2252
        %v2254 = vpop.f32.mrf.mxu0
        %v2255 = vadd.f32 0.0, %v2254
        %2256 = vmatmul.bf16.gmra.mxu0 %v1759
        %v2257 = vpop.f32.mrf.mxu0
        %v2258 = vadd.f32 0.0, %v2257
        %v2259 = vpop.f32.mrf.mxu0
        %v2260 = vadd.f32 0.0, %v2259
        %2261 = vmatmul.bf16.gmra.mxu0 %v1762
        %v2262 = vpop.f32.mrf.mxu0
        %v2263 = vadd.f32 0.0, %v2262
        %v2264 = vpop.f32.mrf.mxu0
        %v2265 = vadd.f32 0.0, %v2264
        %2266 = vmatmul.bf16.gmra.mxu0 %v1765
        %v2267 = vpop.f32.mrf.mxu0
        %v2268 = vadd.f32 0.0, %v2267
        %v2269 = vpop.f32.mrf.mxu0
        %v2270 = vadd.f32 0.0, %v2269
        %2271 = vmatmul.bf16.gmra.mxu0 %v1768
        %v2272 = vpop.f32.mrf.mxu0
        %v2273 = vadd.f32 0.0, %v2272
        %v2274 = vpop.f32.mrf.mxu0
        %v2275 = vadd.f32 0.0, %v2274
        %2276 = vmatmul.bf16.gmra.mxu0 %v1771
        %v2277 = vpop.f32.mrf.mxu0
        %v2278 = vadd.f32 0.0, %v2277
        %v2279 = vpop.f32.mrf.mxu0
        %v2280 = vadd.f32 0.0, %v2279
        %2281 = vmatmul.bf16.gmra.mxu0 %v1774
        %v2282 = vpop.f32.mrf.mxu0
        %v2283 = vadd.f32 0.0, %v2282
        %v2284 = vpop.f32.mrf.mxu0
        %v2285 = vadd.f32 0.0, %v2284
        %2286 = vmatmul.bf16.gmra.mxu0 %v1777
        %v2287 = vpop.f32.mrf.mxu0
        %v2288 = vadd.f32 0.0, %v2287
        %v2289 = vpop.f32.mrf.mxu0
        %v2290 = vadd.f32 0.0, %v2289
        %2291 = vmatmul.bf16.gmra.mxu0 %v1780
        %v2292 = vpop.f32.mrf.mxu0
        %v2293 = vadd.f32 0.0, %v2292
        %v2294 = vpop.f32.mrf.mxu0
        %v2295 = vadd.f32 0.0, %v2294
        %2296 = vmatmul.bf16.gmra.mxu0 %v1783
        %v2297 = vpop.f32.mrf.mxu0
        %v2298 = vadd.f32 0.0, %v2297
        %v2299 = vpop.f32.mrf.mxu0
        %v2300 = vadd.f32 0.0, %v2299
        %2301 = vmatmul.bf16.gmra.mxu0 %v2213
        %v2302 = vpop.f32.mrf.mxu0
        %v2303 = vadd.f32 0.0, %v2302
        %v2304 = vpop.f32.mrf.mxu0
        %v2305 = vadd.f32 0.0, %v2304
        %2306 = vdwg.mxu0
        %v2307 = vadd.f32 %v2167, %v2228
        %v2308 = vadd.f32 %v2168, %v2230
        %v2309 = vadd.f32 %v2169, %v2233
        %v2310 = vadd.f32 %v2170, %v2235
        %v2311 = vadd.f32 %v2171, %v2238
        %v2312 = vadd.f32 %v2172, %v2240
        %v2313 = vadd.f32 %v2173, %v2243
        %v2314 = vadd.f32 %v2174, %v2245
        %v2315 = vadd.f32 %v2175, %v2248
        %v2316 = vadd.f32 %v2176, %v2250
        %v2317 = vadd.f32 %v2177, %v2253
        %v2318 = vadd.f32 %v2178, %v2255
        %v2319 = vadd.f32 %v2179, %v2258
        %v2320 = vadd.f32 %v2180, %v2260
        %v2321 = vadd.f32 %v2181, %v2263
        %v2322 = vadd.f32 %v2182, %v2265
        %v2323 = vadd.f32 %v2183, %v2268
        %v2324 = vadd.f32 %v2184, %v2270
        %v2325 = vadd.f32 %v2185, %v2273
        %v2326 = vadd.f32 %v2186, %v2275
        %v2327 = vadd.f32 %v2187, %v2278
        %v2328 = vadd.f32 %v2188, %v2280
        %v2329 = vadd.f32 %v2189, %v2283
        %v2330 = vadd.f32 %v2190, %v2285
        %v2331 = vadd.f32 %v2191, %v2288
        %v2332 = vadd.f32 %v2192, %v2290
        %v2333 = vadd.f32 %v2193, %v2293
        %v2334 = vadd.f32 %v2194, %v2295
        %v2335 = vadd.f32 %v2195, %v2298
        %v2336 = vadd.f32 %v2196, %v2300
        %v2337 = vadd.f32 %v2197, %v2303
        %v2338 = vadd.f32 %v2198, %v2305
        %s2339 = scalar_lea.vmem %s1, 12
        %v2340 = vld [vmem:[%s2339] sm:$0x3]
        %v2343 = vunpack.c.l.b16 %v750
        %v2344 = vunpack.c.l.b16 %v751
        %v2345 = vpack.c.b16 %v2344, %v2343
        %v2347 = vsel %vm1191, %v2345, 0
        %v2350 = vand.u32 %v2340, %v1243
        %2352 = vmatpush.bf16.msra.mxu0 0
        %2353 = vmatpush.bf16.msra.mxu0 0
        %2354 = vmatpush.bf16.msra.mxu0 0
        %2355 = vmatpush.bf16.msra.mxu0 0
        %2356 = vmatpush.bf16.msra.mxu0 0
        %2357 = vmatpush.bf16.msra.mxu0 0
        %2358 = vmatpush.bf16.msra.mxu0 0
        %2359 = vmatpush.bf16.msra.mxu0 %v2350
        %2360 = vmatmul.bf16.gmra.mxu0 %v1423
        %v2361 = vpop.f32.mrf.mxu0
        %v2362 = vadd.f32 0.0, %v2361
        %v2363 = vpop.f32.mrf.mxu0
        %v2364 = vadd.f32 0.0, %v2363
        %2365 = vmatmul.bf16.gmra.mxu0 %v1426
        %v2366 = vpop.f32.mrf.mxu0
        %v2367 = vadd.f32 0.0, %v2366
        %v2368 = vpop.f32.mrf.mxu0
        %v2369 = vadd.f32 0.0, %v2368
        %2370 = vmatmul.bf16.gmra.mxu0 %v1429
        %v2371 = vpop.f32.mrf.mxu0
        %v2372 = vadd.f32 0.0, %v2371
        %v2373 = vpop.f32.mrf.mxu0
        %v2374 = vadd.f32 0.0, %v2373
        %2375 = vmatmul.bf16.gmra.mxu0 %v1432
        %v2376 = vpop.f32.mrf.mxu0
        %v2377 = vadd.f32 0.0, %v2376
        %v2378 = vpop.f32.mrf.mxu0
        %v2379 = vadd.f32 0.0, %v2378
        %2380 = vmatmul.bf16.gmra.mxu0 %v1435
        %v2381 = vpop.f32.mrf.mxu0
        %v2382 = vadd.f32 0.0, %v2381
        %v2383 = vpop.f32.mrf.mxu0
        %v2384 = vadd.f32 0.0, %v2383
        %2385 = vmatmul.bf16.gmra.mxu0 %v1438
        %v2386 = vpop.f32.mrf.mxu0
        %v2387 = vadd.f32 0.0, %v2386
        %v2388 = vpop.f32.mrf.mxu0
        %v2389 = vadd.f32 0.0, %v2388
        %2390 = vmatmul.bf16.gmra.mxu0 %v1441
        %v2391 = vpop.f32.mrf.mxu0
        %v2392 = vadd.f32 0.0, %v2391
        %v2393 = vpop.f32.mrf.mxu0
        %v2394 = vadd.f32 0.0, %v2393
        %2395 = vmatmul.bf16.gmra.mxu0 %v1444
        %v2396 = vpop.f32.mrf.mxu0
        %v2397 = vadd.f32 0.0, %v2396
        %v2398 = vpop.f32.mrf.mxu0
        %v2399 = vadd.f32 0.0, %v2398
        %2400 = vmatmul.bf16.gmra.mxu0 %v1447
        %v2401 = vpop.f32.mrf.mxu0
        %v2402 = vadd.f32 0.0, %v2401
        %v2403 = vpop.f32.mrf.mxu0
        %v2404 = vadd.f32 0.0, %v2403
        %2405 = vmatmul.bf16.gmra.mxu0 %v1450
        %v2406 = vpop.f32.mrf.mxu0
        %v2407 = vadd.f32 0.0, %v2406
        %v2408 = vpop.f32.mrf.mxu0
        %v2409 = vadd.f32 0.0, %v2408
        %2410 = vmatmul.bf16.gmra.mxu0 %v1453
        %v2411 = vpop.f32.mrf.mxu0
        %v2412 = vadd.f32 0.0, %v2411
        %v2413 = vpop.f32.mrf.mxu0
        %v2414 = vadd.f32 0.0, %v2413
        %2415 = vmatmul.bf16.gmra.mxu0 %v1456
        %v2416 = vpop.f32.mrf.mxu0
        %v2417 = vadd.f32 0.0, %v2416
        %v2418 = vpop.f32.mrf.mxu0
        %v2419 = vadd.f32 0.0, %v2418
        %2420 = vmatmul.bf16.gmra.mxu0 %v1459
        %v2421 = vpop.f32.mrf.mxu0
        %v2422 = vadd.f32 0.0, %v2421
        %v2423 = vpop.f32.mrf.mxu0
        %v2424 = vadd.f32 0.0, %v2423
        %2425 = vmatmul.bf16.gmra.mxu0 %v1462
        %v2426 = vpop.f32.mrf.mxu0
        %v2427 = vadd.f32 0.0, %v2426
        %v2428 = vpop.f32.mrf.mxu0
        %v2429 = vadd.f32 0.0, %v2428
        %2430 = vmatmul.bf16.gmra.mxu0 %v1917
        %v2431 = vpop.f32.mrf.mxu0
        %v2432 = vadd.f32 0.0, %v2431
        %v2433 = vpop.f32.mrf.mxu0
        %v2434 = vadd.f32 0.0, %v2433
        %2435 = vmatmul.bf16.gmra.mxu0 %v2347
        %v2436 = vpop.f32.mrf.mxu0
        %v2437 = vadd.f32 0.0, %v2436
        %v2438 = vpop.f32.mrf.mxu0
        %v2439 = vadd.f32 0.0, %v2438
        %2440 = vdwg.mxu0
        %v2441 = vadd.f32 %v2307, %v2362
        %v2442 = vadd.f32 %v2308, %v2364
        %v2443 = vadd.f32 %v2309, %v2367
        %v2444 = vadd.f32 %v2310, %v2369
        %v2445 = vadd.f32 %v2311, %v2372
        %v2446 = vadd.f32 %v2312, %v2374
        %v2447 = vadd.f32 %v2313, %v2377
        %v2448 = vadd.f32 %v2314, %v2379
        %v2449 = vadd.f32 %v2315, %v2382
        %v2450 = vadd.f32 %v2316, %v2384
        %v2451 = vadd.f32 %v2317, %v2387
        %v2452 = vadd.f32 %v2318, %v2389
        %v2453 = vadd.f32 %v2319, %v2392
        %v2454 = vadd.f32 %v2320, %v2394
        %v2455 = vadd.f32 %v2321, %v2397
        %v2456 = vadd.f32 %v2322, %v2399
        %v2457 = vadd.f32 %v2323, %v2402
        %v2458 = vadd.f32 %v2324, %v2404
        %v2459 = vadd.f32 %v2325, %v2407
        %v2460 = vadd.f32 %v2326, %v2409
        %v2461 = vadd.f32 %v2327, %v2412
        %v2462 = vadd.f32 %v2328, %v2414
        %v2463 = vadd.f32 %v2329, %v2417
        %v2464 = vadd.f32 %v2330, %v2419
        %v2465 = vadd.f32 %v2331, %v2422
        %v2466 = vadd.f32 %v2332, %v2424
        %v2467 = vadd.f32 %v2333, %v2427
        %v2468 = vadd.f32 %v2334, %v2429
        %v2469 = vadd.f32 %v2335, %v2432
        %v2470 = vadd.f32 %v2336, %v2434
        %v2471 = vadd.f32 %v2337, %v2437
        %v2472 = vadd.f32 %v2338, %v2439
        %v2474 = vshrl.u32 %v750, 16
        %v2476 = vrot.slane %v2474, 4
        %v2477 = vshll.u32 %v750, 16
        %v2479 = vrot.slane %v2477, 5
        %v2480 = vor.u32 %v2476, %v2479
        %v2481 = vrot.slane %v2480, 4
        %v2483 = vshll.u32 %v751, 16
        %v2485 = vrot.slane %v2483, 5
        %v2486 = vsel %vm756, %v2481, %v2485
        %v2487 = vshrl.u32 %v751, 16
        %v2489 = vrot.slane %v2487, 4
        %v2490 = vor.u32 %v2489, %v2485
        %v2491 = vrot.slane %v2490, 4
        %v2493 = vshll.u32 %v752, 16
        %v2495 = vrot.slane %v2493, 5
        %v2496 = vsel %vm756, %v2491, %v2495
        %s2497 = scalar_lea.vmem %s1, 14
        %v2498 = vld [vmem:[%s2497] sm:$0x3]
        %v2499 = vunpack.c.l.b16 %v2486
        %v2500 = vunpack.c.l.b16 %v2496
        %v2501 = vpack.c.b16 %v2500, %v2499
        %v2503 = vsel %vm1191, %v2501, 0
        %v2506 = vand.u32 %v2498, %v1243
        %2508 = vmatpush.bf16.msra.mxu0 0
        %2509 = vmatpush.bf16.msra.mxu0 0
        %2510 = vmatpush.bf16.msra.mxu0 0
        %2511 = vmatpush.bf16.msra.mxu0 0
        %2512 = vmatpush.bf16.msra.mxu0 0
        %2513 = vmatpush.bf16.msra.mxu0 0
        %2514 = vmatpush.bf16.msra.mxu0 0
        %2515 = vmatpush.bf16.msra.mxu0 %v2506
        %2516 = vmatmul.bf16.gmra.mxu0 %v1199
        %v2517 = vpop.f32.mrf.mxu0
        %v2518 = vadd.f32 0.0, %v2517
        %v2519 = vpop.f32.mrf.mxu0
        %v2520 = vadd.f32 0.0, %v2519
        %2521 = vmatmul.bf16.gmra.mxu0 %v1202
        %v2522 = vpop.f32.mrf.mxu0
        %v2523 = vadd.f32 0.0, %v2522
        %v2524 = vpop.f32.mrf.mxu0
        %v2525 = vadd.f32 0.0, %v2524
        %2526 = vmatmul.bf16.gmra.mxu0 %v1205
        %v2527 = vpop.f32.mrf.mxu0
        %v2528 = vadd.f32 0.0, %v2527
        %v2529 = vpop.f32.mrf.mxu0
        %v2530 = vadd.f32 0.0, %v2529
        %2531 = vmatmul.bf16.gmra.mxu0 %v1208
        %v2532 = vpop.f32.mrf.mxu0
        %v2533 = vadd.f32 0.0, %v2532
        %v2534 = vpop.f32.mrf.mxu0
        %v2535 = vadd.f32 0.0, %v2534
        %2536 = vmatmul.bf16.gmra.mxu0 %v1211
        %v2537 = vpop.f32.mrf.mxu0
        %v2538 = vadd.f32 0.0, %v2537
        %v2539 = vpop.f32.mrf.mxu0
        %v2540 = vadd.f32 0.0, %v2539
        %2541 = vmatmul.bf16.gmra.mxu0 %v1214
        %v2542 = vpop.f32.mrf.mxu0
        %v2543 = vadd.f32 0.0, %v2542
        %v2544 = vpop.f32.mrf.mxu0
        %v2545 = vadd.f32 0.0, %v2544
        %2546 = vmatmul.bf16.gmra.mxu0 %v1217
        %v2547 = vpop.f32.mrf.mxu0
        %v2548 = vadd.f32 0.0, %v2547
        %v2549 = vpop.f32.mrf.mxu0
        %v2550 = vadd.f32 0.0, %v2549
        %2551 = vmatmul.bf16.gmra.mxu0 %v1220
        %v2552 = vpop.f32.mrf.mxu0
        %v2553 = vadd.f32 0.0, %v2552
        %v2554 = vpop.f32.mrf.mxu0
        %v2555 = vadd.f32 0.0, %v2554
        %2556 = vmatmul.bf16.gmra.mxu0 %v1223
        %v2557 = vpop.f32.mrf.mxu0
        %v2558 = vadd.f32 0.0, %v2557
        %v2559 = vpop.f32.mrf.mxu0
        %v2560 = vadd.f32 0.0, %v2559
        %2561 = vmatmul.bf16.gmra.mxu0 %v1226
        %v2562 = vpop.f32.mrf.mxu0
        %v2563 = vadd.f32 0.0, %v2562
        %v2564 = vpop.f32.mrf.mxu0
        %v2565 = vadd.f32 0.0, %v2564
        %2566 = vmatmul.bf16.gmra.mxu0 %v1229
        %v2567 = vpop.f32.mrf.mxu0
        %v2568 = vadd.f32 0.0, %v2567
        %v2569 = vpop.f32.mrf.mxu0
        %v2570 = vadd.f32 0.0, %v2569
        %2571 = vmatmul.bf16.gmra.mxu0 %v1232
        %v2572 = vpop.f32.mrf.mxu0
        %v2573 = vadd.f32 0.0, %v2572
        %v2574 = vpop.f32.mrf.mxu0
        %v2575 = vadd.f32 0.0, %v2574
        %2576 = vmatmul.bf16.gmra.mxu0 %v1235
        %v2577 = vpop.f32.mrf.mxu0
        %v2578 = vadd.f32 0.0, %v2577
        %v2579 = vpop.f32.mrf.mxu0
        %v2580 = vadd.f32 0.0, %v2579
        %2581 = vmatmul.bf16.gmra.mxu0 %v1238
        %v2582 = vpop.f32.mrf.mxu0
        %v2583 = vadd.f32 0.0, %v2582
        %v2584 = vpop.f32.mrf.mxu0
        %v2585 = vadd.f32 0.0, %v2584
        %2586 = vmatmul.bf16.gmra.mxu0 %v2073
        %v2587 = vpop.f32.mrf.mxu0
        %v2588 = vadd.f32 0.0, %v2587
        %v2589 = vpop.f32.mrf.mxu0
        %v2590 = vadd.f32 0.0, %v2589
        %2591 = vmatmul.bf16.gmra.mxu0 %v2503
        %v2592 = vpop.f32.mrf.mxu0
        %v2593 = vadd.f32 0.0, %v2592
        %v2594 = vpop.f32.mrf.mxu0
        %v2595 = vadd.f32 0.0, %v2594
        %2596 = vdwg.mxu0
        %v2597 = vadd.f32 %v2441, %v2518
        %v2598 = vadd.f32 %v2442, %v2520
        %v2599 = vadd.f32 %v2443, %v2523
        %v2600 = vadd.f32 %v2444, %v2525
        %v2601 = vadd.f32 %v2445, %v2528
        %v2602 = vadd.f32 %v2446, %v2530
        %v2603 = vadd.f32 %v2447, %v2533
        %v2604 = vadd.f32 %v2448, %v2535
        %v2605 = vadd.f32 %v2449, %v2538
        %v2606 = vadd.f32 %v2450, %v2540
        %v2607 = vadd.f32 %v2451, %v2543
        %v2608 = vadd.f32 %v2452, %v2545
        %v2609 = vadd.f32 %v2453, %v2548
        %v2610 = vadd.f32 %v2454, %v2550
        %v2611 = vadd.f32 %v2455, %v2553
        %v2612 = vadd.f32 %v2456, %v2555
        %v2613 = vadd.f32 %v2457, %v2558
        %v2614 = vadd.f32 %v2458, %v2560
        %v2615 = vadd.f32 %v2459, %v2563
        %v2616 = vadd.f32 %v2460, %v2565
        %v2617 = vadd.f32 %v2461, %v2568
        %v2618 = vadd.f32 %v2462, %v2570
        %v2619 = vadd.f32 %v2463, %v2573
        %v2620 = vadd.f32 %v2464, %v2575
        %v2621 = vadd.f32 %v2465, %v2578
        %v2622 = vadd.f32 %v2466, %v2580
        %v2623 = vadd.f32 %v2467, %v2583
        %v2624 = vadd.f32 %v2468, %v2585
        %v2625 = vadd.f32 %v2469, %v2588
        %v2626 = vadd.f32 %v2470, %v2590
        %v2627 = vadd.f32 %v2471, %v2593
        %v2628 = vadd.f32 %v2472, %v2595
        %v2630 = vrot.slane %v750, 5
        %v2631 = vrot.slane %v2630, 4
        %v2632 = vrot.slane %v751, 5
        %v2633 = vsel %vm1574, %v2631, %v2632
        %v2634 = vrot.slane %v2632, 4
        %v2635 = vrot.slane %v752, 5
        %v2636 = vsel %vm1574, %v2634, %v2635
        %s2637 = scalar_lea.vmem %s1, 16
        %v2638 = vld [vmem:[%s2637] sm:$0x3]
        %v2639 = vunpack.c.l.b16 %v2633
        %v2640 = vunpack.c.l.b16 %v2636
        %v2641 = vpack.c.b16 %v2640, %v2639
        %v2643 = vsel %vm1191, %v2641, 0
        %v2646 = vand.u32 %v2638, %v1243
        %2648 = vmatpush.bf16.msra.mxu0 0
        %2649 = vmatpush.bf16.msra.mxu0 0
        %2650 = vmatpush.bf16.msra.mxu0 0
        %2651 = vmatpush.bf16.msra.mxu0 0
        %2652 = vmatpush.bf16.msra.mxu0 0
        %2653 = vmatpush.bf16.msra.mxu0 0
        %2654 = vmatpush.bf16.msra.mxu0 0
        %2655 = vmatpush.bf16.msra.mxu0 %v2646
        %2656 = vmatmul.bf16.gmra.mxu0 %v1744
        %v2657 = vpop.f32.mrf.mxu0
        %v2658 = vadd.f32 0.0, %v2657
        %v2659 = vpop.f32.mrf.mxu0
        %v2660 = vadd.f32 0.0, %v2659
        %2661 = vmatmul.bf16.gmra.mxu0 %v1747
        %v2662 = vpop.f32.mrf.mxu0
        %v2663 = vadd.f32 0.0, %v2662
        %v2664 = vpop.f32.mrf.mxu0
        %v2665 = vadd.f32 0.0, %v2664
        %2666 = vmatmul.bf16.gmra.mxu0 %v1750
        %v2667 = vpop.f32.mrf.mxu0
        %v2668 = vadd.f32 0.0, %v2667
        %v2669 = vpop.f32.mrf.mxu0
        %v2670 = vadd.f32 0.0, %v2669
        %2671 = vmatmul.bf16.gmra.mxu0 %v1753
        %v2672 = vpop.f32.mrf.mxu0
        %v2673 = vadd.f32 0.0, %v2672
        %v2674 = vpop.f32.mrf.mxu0
        %v2675 = vadd.f32 0.0, %v2674
        %2676 = vmatmul.bf16.gmra.mxu0 %v1756
        %v2677 = vpop.f32.mrf.mxu0
        %v2678 = vadd.f32 0.0, %v2677
        %v2679 = vpop.f32.mrf.mxu0
        %v2680 = vadd.f32 0.0, %v2679
        %2681 = vmatmul.bf16.gmra.mxu0 %v1759
        %v2682 = vpop.f32.mrf.mxu0
        %v2683 = vadd.f32 0.0, %v2682
        %v2684 = vpop.f32.mrf.mxu0
        %v2685 = vadd.f32 0.0, %v2684
        %2686 = vmatmul.bf16.gmra.mxu0 %v1762
        %v2687 = vpop.f32.mrf.mxu0
        %v2688 = vadd.f32 0.0, %v2687
        %v2689 = vpop.f32.mrf.mxu0
        %v2690 = vadd.f32 0.0, %v2689
        %2691 = vmatmul.bf16.gmra.mxu0 %v1765
        %v2692 = vpop.f32.mrf.mxu0
        %v2693 = vadd.f32 0.0, %v2692
        %v2694 = vpop.f32.mrf.mxu0
        %v2695 = vadd.f32 0.0, %v2694
        %2696 = vmatmul.bf16.gmra.mxu0 %v1768
        %v2697 = vpop.f32.mrf.mxu0
        %v2698 = vadd.f32 0.0, %v2697
        %v2699 = vpop.f32.mrf.mxu0
        %v2700 = vadd.f32 0.0, %v2699
        %2701 = vmatmul.bf16.gmra.mxu0 %v1771
        %v2702 = vpop.f32.mrf.mxu0
        %v2703 = vadd.f32 0.0, %v2702
        %v2704 = vpop.f32.mrf.mxu0
        %v2705 = vadd.f32 0.0, %v2704
        %2706 = vmatmul.bf16.gmra.mxu0 %v1774
        %v2707 = vpop.f32.mrf.mxu0
        %v2708 = vadd.f32 0.0, %v2707
        %v2709 = vpop.f32.mrf.mxu0
        %v2710 = vadd.f32 0.0, %v2709
        %2711 = vmatmul.bf16.gmra.mxu0 %v1777
        %v2712 = vpop.f32.mrf.mxu0
        %v2713 = vadd.f32 0.0, %v2712
        %v2714 = vpop.f32.mrf.mxu0
        %v2715 = vadd.f32 0.0, %v2714
        %2716 = vmatmul.bf16.gmra.mxu0 %v1780
        %v2717 = vpop.f32.mrf.mxu0
        %v2718 = vadd.f32 0.0, %v2717
        %v2719 = vpop.f32.mrf.mxu0
        %v2720 = vadd.f32 0.0, %v2719
        %2721 = vmatmul.bf16.gmra.mxu0 %v1783
        %v2722 = vpop.f32.mrf.mxu0
        %v2723 = vadd.f32 0.0, %v2722
        %v2724 = vpop.f32.mrf.mxu0
        %v2725 = vadd.f32 0.0, %v2724
        %2726 = vmatmul.bf16.gmra.mxu0 %v2213
        %v2727 = vpop.f32.mrf.mxu0
        %v2728 = vadd.f32 0.0, %v2727
        %v2729 = vpop.f32.mrf.mxu0
        %v2730 = vadd.f32 0.0, %v2729
        %2731 = vmatmul.bf16.gmra.mxu0 %v2643
        %v2732 = vpop.f32.mrf.mxu0
        %v2733 = vadd.f32 0.0, %v2732
        %v2734 = vpop.f32.mrf.mxu0
        %v2735 = vadd.f32 0.0, %v2734
        %2736 = vdwg.mxu0
        %v2737 = vadd.f32 %v2597, %v2658
        %v2738 = vadd.f32 %v2598, %v2660
        %v2739 = vadd.f32 %v2599, %v2663
        %v2740 = vadd.f32 %v2600, %v2665
        %v2741 = vadd.f32 %v2601, %v2668
        %v2742 = vadd.f32 %v2602, %v2670
        %v2743 = vadd.f32 %v2603, %v2673
        %v2744 = vadd.f32 %v2604, %v2675
        %v2745 = vadd.f32 %v2605, %v2678
        %v2746 = vadd.f32 %v2606, %v2680
        %v2747 = vadd.f32 %v2607, %v2683
        %v2748 = vadd.f32 %v2608, %v2685
        %v2749 = vadd.f32 %v2609, %v2688
        %v2750 = vadd.f32 %v2610, %v2690
        %v2751 = vadd.f32 %v2611, %v2693
        %v2752 = vadd.f32 %v2612, %v2695
        %v2753 = vadd.f32 %v2613, %v2698
        %v2754 = vadd.f32 %v2614, %v2700
        %v2755 = vadd.f32 %v2615, %v2703
        %v2756 = vadd.f32 %v2616, %v2705
        %v2757 = vadd.f32 %v2617, %v2708
        %v2758 = vadd.f32 %v2618, %v2710
        %v2759 = vadd.f32 %v2619, %v2713
        %v2760 = vadd.f32 %v2620, %v2715
        %v2761 = vadd.f32 %v2621, %v2718
        %v2762 = vadd.f32 %v2622, %v2720
        %v2763 = vadd.f32 %v2623, %v2723
        %v2764 = vadd.f32 %v2624, %v2725
        %v2765 = vadd.f32 %v2625, %v2728
        %v2766 = vadd.f32 %v2626, %v2730
        %v2767 = vadd.f32 %v2627, %v2733
        %v2768 = vadd.f32 %v2628, %v2735
        %v2769 = vld [vmem:[%s2] sm:$0x1]
        %v2771 = vperm.slane %v2769, 0
        %v2773 = vadd.f32 %v2737, %v2771
        %v2774 = vadd.f32 %v2738, %v2771
        %v2775 = vadd.f32 %v2739, %v2771
        %v2776 = vadd.f32 %v2740, %v2771
        %v2777 = vadd.f32 %v2741, %v2771
        %v2778 = vadd.f32 %v2742, %v2771
        %v2779 = vadd.f32 %v2743, %v2771
        %v2780 = vadd.f32 %v2744, %v2771
        %v2781 = vadd.f32 %v2745, %v2771
        %v2782 = vadd.f32 %v2746, %v2771
        %v2783 = vadd.f32 %v2747, %v2771
        %v2784 = vadd.f32 %v2748, %v2771
        %v2785 = vadd.f32 %v2749, %v2771
        %v2786 = vadd.f32 %v2750, %v2771
        %v2787 = vadd.f32 %v2751, %v2771
        %v2788 = vadd.f32 %v2752, %v2771
        %v2789 = vadd.f32 %v2753, %v2771
        %v2790 = vadd.f32 %v2754, %v2771
        %v2791 = vadd.f32 %v2755, %v2771
        %v2792 = vadd.f32 %v2756, %v2771
        %v2793 = vadd.f32 %v2757, %v2771
        %v2794 = vadd.f32 %v2758, %v2771
        %v2795 = vadd.f32 %v2759, %v2771
        %v2796 = vadd.f32 %v2760, %v2771
        %v2797 = vadd.f32 %v2761, %v2771
        %v2798 = vadd.f32 %v2762, %v2771
        %v2799 = vadd.f32 %v2763, %v2771
        %v2800 = vadd.f32 %v2764, %v2771
        %v2801 = vadd.f32 %v2765, %v2771
        %v2802 = vadd.f32 %v2766, %v2771
        %v2803 = vadd.f32 %v2767, %v2771
        %v2804 = vadd.f32 %v2768, %v2771
        %v2805 = vpack.c.bf16 %v2773, %v2773
        %v2806 = vpack.c.bf16 %v2774, %v2774
        %v2807 = vpack.c.bf16 %v2775, %v2775
        %v2808 = vpack.c.bf16 %v2776, %v2776
        %v2809 = vpack.c.bf16 %v2777, %v2777
        %v2810 = vpack.c.bf16 %v2778, %v2778
        %v2811 = vpack.c.bf16 %v2779, %v2779
        %v2812 = vpack.c.bf16 %v2780, %v2780
        %v2813 = vpack.c.bf16 %v2781, %v2781
        %v2814 = vpack.c.bf16 %v2782, %v2782
        %v2815 = vpack.c.bf16 %v2783, %v2783
        %v2816 = vpack.c.bf16 %v2784, %v2784
        %v2817 = vpack.c.bf16 %v2785, %v2785
        %v2818 = vpack.c.bf16 %v2786, %v2786
        %v2819 = vpack.c.bf16 %v2787, %v2787
        %v2820 = vpack.c.bf16 %v2788, %v2788
        %v2821 = vpack.c.bf16 %v2789, %v2789
        %v2822 = vpack.c.bf16 %v2790, %v2790
        %v2823 = vpack.c.bf16 %v2791, %v2791
        %v2824 = vpack.c.bf16 %v2792, %v2792
        %v2825 = vpack.c.bf16 %v2793, %v2793
        %v2826 = vpack.c.bf16 %v2794, %v2794
        %v2827 = vpack.c.bf16 %v2795, %v2795
        %v2828 = vpack.c.bf16 %v2796, %v2796
        %v2829 = vpack.c.bf16 %v2797, %v2797
        %v2830 = vpack.c.bf16 %v2798, %v2798
        %v2831 = vpack.c.bf16 %v2799, %v2799
        %v2832 = vpack.c.bf16 %v2800, %v2800
        %v2833 = vpack.c.bf16 %v2801, %v2801
        %v2834 = vpack.c.bf16 %v2802, %v2802
        %v2835 = vpack.c.bf16 %v2803, %v2803
        %v2836 = vpack.c.bf16 %v2804, %v2804
        %vm2837 = vcmask 125952
        %2838 = vst.msk [vmem:[%s163] sm:$0xf] %vm2837, %v2805
        %2839 = vst.msk [vmem:[%s163 + $0x4] sm:$0xf] %vm2837, %v2806
        %2840 = vst.msk [vmem:[%s163 + $0x8] sm:$0xf] %vm2837, %v2807
        %2841 = vst.msk [vmem:[%s163 + $0xc] sm:$0xf] %vm2837, %v2808
        %2842 = vst.msk [vmem:[%s163 + $0x10] sm:$0xf] %vm2837, %v2809
        %2843 = vst.msk [vmem:[%s163 + $0x14] sm:$0xf] %vm2837, %v2810
        %2844 = vst.msk [vmem:[%s163 + $0x18] sm:$0xf] %vm2837, %v2811
        %2845 = vst.msk [vmem:[%s163 + $0x1c] sm:$0xf] %vm2837, %v2812
        %2846 = vst.msk [vmem:[%s163 + $0x20] sm:$0xf] %vm2837, %v2813
        %2847 = vst.msk [vmem:[%s163 + $0x24] sm:$0xf] %vm2837, %v2814
        %2848 = vst.msk [vmem:[%s163 + $0x28] sm:$0xf] %vm2837, %v2815
        %2849 = vst.msk [vmem:[%s163 + $0x2c] sm:$0xf] %vm2837, %v2816
        %2850 = vst.msk [vmem:[%s163 + $0x30] sm:$0xf] %vm2837, %v2817
        %2851 = vst.msk [vmem:[%s163 + $0x34] sm:$0xf] %vm2837, %v2818
        %2852 = vst.msk [vmem:[%s163 + $0x38] sm:$0xf] %vm2837, %v2819
        %2853 = vst.msk [vmem:[%s163 + $0x3c] sm:$0xf] %vm2837, %v2820
        %2854 = vst.msk [vmem:[%s163 + $0x40] sm:$0xf] %vm2837, %v2821
        %2855 = vst.msk [vmem:[%s163 + $0x44] sm:$0xf] %vm2837, %v2822
        %2856 = vst.msk [vmem:[%s163 + $0x48] sm:$0xf] %vm2837, %v2823
        %2857 = vst.msk [vmem:[%s163 + $0x4c] sm:$0xf] %vm2837, %v2824
        %2858 = vst.msk [vmem:[%s163 + $0x50] sm:$0xf] %vm2837, %v2825
        %2859 = vst.msk [vmem:[%s163 + $0x54] sm:$0xf] %vm2837, %v2826
        %2860 = vst.msk [vmem:[%s163 + $0x58] sm:$0xf] %vm2837, %v2827
        %2861 = vst.msk [vmem:[%s163 + $0x5c] sm:$0xf] %vm2837, %v2828
        %2862 = vst.msk [vmem:[%s163 + $0x60] sm:$0xf] %vm2837, %v2829
        %2863 = vst.msk [vmem:[%s163 + $0x64] sm:$0xf] %vm2837, %v2830
        %2864 = vst.msk [vmem:[%s163 + $0x68] sm:$0xf] %vm2837, %v2831
        %2865 = vst.msk [vmem:[%s163 + $0x6c] sm:$0xf] %vm2837, %v2832
        %2866 = vst.msk [vmem:[%s163 + $0x70] sm:$0xf] %vm2837, %v2833
        %2867 = vst.msk [vmem:[%s163 + $0x74] sm:$0xf] %vm2837, %v2834
        %2868 = vst.msk [vmem:[%s163 + $0x78] sm:$0xf] %vm2837, %v2835
        %2869 = vst.msk [vmem:[%s163 + $0x7c] sm:$0xf] %vm2837, %v2836
        %s2870 = sand.u32 %s93, 1
        %s2871 = scalar_lea.sflag [#allocation4], %s2870
        %s2872 = sand.u32 %s93, 1
        %s2873 = smul.addr %s2872, 128
        %s2874 = scalar_lea.vmem [#allocation3], %s2873
        // Predicated region
        $region33: #{_cat_conv.1} parent=31 // pred_check
          %p2875 = pneg %p103
        $region34: #{_cat_conv.1} parent=31 // pred_check_branch
          %2877 = sbr.rel (%p2875) target = $region36
        $region35: #{_cat_conv.1} parent=31 // pred_region
          %2879 = vsyncadd %s2871, 0
          %s2880 = smul.addr %s17, 32
          %s2881 = smul.addr %s2880, 4
          %s2882 = scalar_lea.hbm %s3, %s2881
          %s2883 = sshll.u32 %s2874, 4
          %s2884 = int_to_ptr.vmem [resolvable:$true] %s2883
          %s2885 = sshll.u32 %s2882, 4
          %s2886 = int_to_ptr.hbm [resolvable:$true] %s2885
          %2891 = dma.vmem_to_hbm [thread:$0]  %s2884, 2048, %s2886, %s2871, 64, 64, 4
        $region36: #{_cat_conv.1} parent=31 // pred_fallthru
          _
      $region32: #{_cat_conv.1} parent=5 // pred_fallthru
        _
      %p2892 = scmp.le.s32.totalorder 2, %s12
      // Predicated region
      $region37: #{_cat_conv.1} parent=5 // pred_check
        %p2893 = pneg %p2892
      $region38: #{_cat_conv.1} parent=5 // pred_check_branch
        %2895 = sbr.rel (%p2893) target = $region40
      $region39: #{_cat_conv.1} parent=5 // pred_region
        %s2896 = ssub.s32 %s12, 2
        // Predicated region
        $region41: #{_cat_conv.1} parent=39 // pred_check
          %p2897 = pneg %p109
        $region42: #{_cat_conv.1} parent=39 // pred_check_branch
          %2899 = sbr.rel (%p2897) target = $region44
        $region43: #{_cat_conv.1} parent=39 // pred_region
          %s2900 = sand.u32 %s94, 1
          %s2901 = scalar_lea.sflag [#allocation4], %s2900
          %s2902 = sand.u32 %s94, 1
          %s2903 = smul.addr %s2902, 128
          %s2904 = scalar_lea.vmem [#allocation3], %s2903
          %2906 = dma.done %s2901, 2048
        $region44: #{_cat_conv.1} parent=39 // pred_fallthru
          _
      $region40: #{_cat_conv.1} parent=5 // pred_fallthru
        _
    $region6: #{_cat_conv.1} parent=1 // loop_footer
      %s16 = sadd.s32 1, %s12
    $region7: #{_cat_conv.1} parent=1 // loop_footer_branch
      %11 = sbr.rel target = $region3
    $region8: #{_cat_conv.1} parent=1 // loop_exit
      _
    %2907 = vsyncpa [#allocation4], 1
    %s2908 = scalar_lea.sflag [#allocation4], 1
    %2909 = vsyncpa %s2908, 1

</llo_original>
